<compile_context>
chip_gen: v7x
topology: tpu7x:2x2x1
jax: 0.10.0
libtpu: 0.0.40
codegen_flags: <defaults>
</compile_context>

<pallas_src>
import functools

import jax
import jax.numpy as jnp
from jax.experimental import pallas as pl
from jax.experimental.pallas import tpu as pltpu


def _sdpa_kernel(q_ref, k_ref, v_ref, ctx_ref, attn_ref,
                 m_scr, l_scr, acc_scr, *, scale, nk):
    j = pl.program_id(2)

    @pl.when(j == 0)
    def _init():
        m_scr[...] = jnp.full(m_scr.shape, -jnp.inf, dtype=m_scr.dtype)
        l_scr[...] = jnp.zeros(l_scr.shape, dtype=l_scr.dtype)
        acc_scr[...] = jnp.zeros(acc_scr.shape, dtype=acc_scr.dtype)

    # Fold scale into the q tile (cheap: O(tq*D)); operands stay in input dtype.
    q = q_ref[...]
    if scale:  # mirrors the PyTorch `if scale:` (falsy -> no scaling)
        q = q * jnp.asarray(scale, dtype=q.dtype)

    # (1, tq, tk) scores; input-dtype MXU operands, f32 accumulation.
    s = jnp.einsum("bqd,bkd->bqk", q, k_ref[...],
                   preferred_element_type=jnp.float32)

    @pl.when(j < nk)
    def _stats_pass():
        # Online max / rescaled-sum statistics over the key axis.
        m_prev = m_scr[...]
        m_new = jnp.maximum(m_prev, jnp.max(s, axis=-1, keepdims=True))
        l_scr[...] = (l_scr[...] * jnp.exp(m_prev - m_new)
                      + jnp.sum(jnp.exp(s - m_new), axis=-1, keepdims=True))
        m_scr[...] = m_new

    @pl.when(j >= nk)
    def _emit_pass():
        # Final row max / denominator are known: emit the exact softmax tile.
        l = l_scr[...]
        inv_l = pl.reciprocal(l, approx=True)          # EUP slot
        inv_l = inv_l * (2.0 - l * inv_l)              # one Newton step (~f32 exact)
        p = jnp.exp(s - m_scr[...]) * inv_l            # (1, tq, tk) f32
        attn_ref[...] = p.astype(attn_ref.dtype)
        acc_scr[...] += jnp.einsum("bqk,bkd->bqd",
                                   p.astype(v_ref.dtype), v_ref[...],
                                   preferred_element_type=jnp.float32)

    @pl.when(j == 2 * nk - 1)
    def _finalize():
        ctx_ref[...] = acc_scr[...].astype(ctx_ref.dtype)


def _pick_tile(dim, candidates):
    # Tile must divide the dim and be (8,128)-friendly; otherwise use the full
    # extent (always legal for a BlockSpec dim).
    for t in candidates:
        if dim % t == 0:
            return t
    return dim


def scaled_dot_product_attention(q, k, v, scale=None):
    """q: [B, Lq, D], k: [B, Lk, D], v: [B, Lk, Dv] -> (context, attention)."""
    B, Lq, D = q.shape
    Bk, Lk, Dk = k.shape
    Bv, Lv, Dv = v.shape
    assert D == Dk and Bk == B and Bv == B and Lv == Lk

    tq = _pick_tile(Lq, (128, 256))        # M-dim tile
    tk = _pick_tile(Lk, (256, 128))        # key / attention-lane tile (lane dense)
    nq = Lq // tq
    nk = Lk // tk

    kernel = functools.partial(_sdpa_kernel, scale=scale, nk=nk)

    itemsize = jnp.dtype(q.dtype).itemsize
    cost = pl.CostEstimate(
        # q@k^T computed twice (stats + emit pass) + attention @ v
        flops=2 * B * Lq * Lk * (2 * D + Dv),
        transcendentals=2 * B * Lq * Lk,
        bytes_accessed=(B * Lq * D            # q read
                        + 2 * B * Lk * D      # k read (two passes)
                        + B * Lk * Dv         # v read
                        + B * Lq * Dv         # context write
                        + B * Lq * Lk         # attention write
                        ) * itemsize,
    )

    ctx, attn = pl.pallas_call(
        kernel,
        out_shape=(
            jax.ShapeDtypeStruct((B, Lq, Dv), q.dtype),   # context
            jax.ShapeDtypeStruct((B, Lq, Lk), q.dtype),   # attention (input dtype)
        ),
        grid_spec=pltpu.PrefetchScalarGridSpec(
            num_scalar_prefetch=0,
            grid=(B, nq, 2 * nk),
            in_specs=[
                # q tile resident across the whole key loop
                pl.BlockSpec((1, tq, D), lambda b, i, j: (b, i, 0)),
                # k tile: streamed in both passes
                pl.BlockSpec((1, tk, D), lambda b, i, j: (b, j % nk, 0)),
                # v tile: only needed in pass 2 (stays pinned at tile 0 in pass 1)
                pl.BlockSpec((1, tk, Dv), lambda b, i, j: (b, jnp.maximum(j - nk, 0), 0)),
            ],
            out_specs=(
                # context: resident accumulator target, written at the last step
                pl.BlockSpec((1, tq, Dv), lambda b, i, j: (b, i, 0)),
                # attention: pinned at tile 0 during pass 1 (never flushed until
                # written), then streamed out tile-by-tile during pass 2
                pl.BlockSpec((1, tq, tk), lambda b, i, j: (b, i, jnp.maximum(j - nk, 0))),
            ),
            scratch_shapes=[
                pltpu.VMEM((1, tq, 1), jnp.float32),    # running max m
                pltpu.VMEM((1, tq, 1), jnp.float32),    # running denom l
                pltpu.VMEM((1, tq, Dv), jnp.float32),   # f32 context accumulator
            ],
        ),
        compiler_params=pltpu.CompilerParams(
            dimension_semantics=("parallel", "parallel", "arbitrary"),
        ),
        cost_estimate=cost,
    )(q, k, v)
    return ctx, attn


def _reference(q, k, v, scale=None):
    s = jnp.einsum("bqd,bkd->bqk", q, k)
    if scale:
        s = s * scale
    attn = jax.nn.softmax(s, axis=2)
    ctx = jnp.einsum("bqk,bkd->bqd", attn, v)
    return ctx, attn


if __name__ == "__main__":
    key = jax.random.PRNGKey(0)
    kq, kk, kv = jax.random.split(key, 3)

    # Small but tiling-meaningful shapes: grid=(2, 2, 4) -> 4 parallel work units.
    B, Lq, Lk, D, Dv = 2, 256, 512, 128, 128
    q = jax.random.normal(kq, (B, Lq, D), dtype=jnp.float32)
    k = jax.random.normal(kk, (B, Lk, D), dtype=jnp.float32)
    v = jax.random.normal(kv, (B, Lk, Dv), dtype=jnp.float32)
    scale = 1.0 / (D ** 0.5)

    # f32 path
    ctx, attn = scaled_dot_product_attention(q, k, v, scale=scale)
    jax.block_until_ready((ctx, attn))

    ref_ctx, ref_attn = _reference(q, k, v, scale=scale)
    assert jnp.allclose(ctx, ref_ctx, atol=2e-4, rtol=2e-4), "context mismatch (f32)"
    assert jnp.allclose(attn, ref_attn, atol=2e-4, rtol=2e-4), "attention mismatch (f32)"

    # bf16 path: MXU-native operand dtype, f32 accumulation inside the kernel.
    qb, kb, vb = (q.astype(jnp.bfloat16), k.astype(jnp.bfloat16),
                  v.astype(jnp.bfloat16))
    ctx_b, attn_b = scaled_dot_product_attention(qb, kb, vb, scale=scale)
    jax.block_until_ready((ctx_b, attn_b))
    assert jnp.allclose(ctx_b.astype(jnp.float32), ref_ctx,
                        atol=5e-2, rtol=5e-2), "context mismatch (bf16)"
    assert jnp.allclose(attn_b.astype(jnp.float32), ref_attn,
                        atol=5e-2, rtol=5e-2), "attention mismatch (bf16)"

    print("KERNEL_OK")
</pallas_src>

<mosaic_0001>
module attributes {stable_mosaic.version = 11 : i64} {
  func.func @_sdpa_kernel(%arg0: i32, %arg1: i32, %arg2: i32, %arg3: memref<1x128x128xf32, #tpu.memory_space<vmem>>, %arg4: memref<1x256x128xf32, #tpu.memory_space<vmem>>, %arg5: memref<1x256x128xf32, #tpu.memory_space<vmem>>, %arg6: memref<1x128x128xf32, #tpu.memory_space<vmem>>, %arg7: memref<1x128x256xf32, #tpu.memory_space<vmem>>, %arg8: memref<1x128x1xf32, #tpu.memory_space<vmem>>, %arg9: memref<1x128x1xf32, #tpu.memory_space<vmem>>, %arg10: memref<1x128x128xf32, #tpu.memory_space<vmem>>) attributes {dimension_semantics = [#tpu.dimension_semantics<parallel>, #tpu.dimension_semantics<parallel>, #tpu.dimension_semantics<arbitrary>], iteration_bounds = array<i64: 2, 2, 4>, scalar_prefetch = 0 : i64, scratch_operands = 3 : i64, tpu.core_type = #tpu.core_type<tc>, window_params = [{transform_indices = @transform_0, window_bounds = array<i64: 1, 128, 128>}, {transform_indices = @transform_1, window_bounds = array<i64: 1, 256, 128>}, {transform_indices = @transform_2, window_bounds = array<i64: 1, 256, 128>}, {transform_indices = @transform_3, window_bounds = array<i64: 1, 128, 128>}, {transform_indices = @transform_4, window_bounds = array<i64: 1, 128, 256>}]} {
    %c0_i32 = arith.constant 0 : i32
    %0 = arith.cmpi eq, %arg2, %c0_i32 : i32
    %1 = arith.extui %0 : i1 to i32
    %c0_i32_0 = arith.constant 0 : i32
    %2 = arith.cmpi ne, %1, %c0_i32_0 : i32
    scf.if %2 {
      %cst_11 = arith.constant 0xFF800000 : f32
      %17 = vector.broadcast %cst_11 : f32 to vector<1x128x1xf32>
      %c0_12 = arith.constant 0 : index
      %c0_13 = arith.constant 0 : index
      %c0_14 = arith.constant 0 : index
      %18 = vector.load %arg8[%c0_12, %c0_13, %c0_14] : memref<1x128x1xf32, #tpu.memory_space<vmem>>, vector<1x128x1xf32>
      tpu.vector_store %arg8[%c0_12, %c0_13, %c0_14], %17 {strides = array<i32>} : memref<1x128x1xf32, #tpu.memory_space<vmem>>, vector<1x128x1xf32>,
      %cst_15 = arith.constant 0.000000e+00 : f32
      %19 = vector.broadcast %cst_15 : f32 to vector<1x128x1xf32>
      %c0_16 = arith.constant 0 : index
      %c0_17 = arith.constant 0 : index
      %c0_18 = arith.constant 0 : index
      %20 = vector.load %arg9[%c0_16, %c0_17, %c0_18] : memref<1x128x1xf32, #tpu.memory_space<vmem>>, vector<1x128x1xf32>
      tpu.vector_store %arg9[%c0_16, %c0_17, %c0_18], %19 {strides = array<i32>} : memref<1x128x1xf32, #tpu.memory_space<vmem>>, vector<1x128x1xf32>,
      %cst_19 = arith.constant 0.000000e+00 : f32
      %21 = vector.broadcast %cst_19 : f32 to vector<1x128x128xf32>
      %c0_20 = arith.constant 0 : index
      %c0_21 = arith.constant 0 : index
      %c0_22 = arith.constant 0 : index
      %22 = vector.load %arg10[%c0_20, %c0_21, %c0_22] : memref<1x128x128xf32, #tpu.memory_space<vmem>>, vector<1x128x128xf32>
      tpu.vector_store %arg10[%c0_20, %c0_21, %c0_22], %21 {strides = array<i32>} : memref<1x128x128xf32, #tpu.memory_space<vmem>>, vector<1x128x128xf32>,
    } else {
    }
    %c0 = arith.constant 0 : index
    %c0_1 = arith.constant 0 : index
    %c0_2 = arith.constant 0 : index
    %3 = vector.load %arg3[%c0, %c0_1, %c0_2] : memref<1x128x128xf32, #tpu.memory_space<vmem>>, vector<1x128x128xf32>
    %cst = arith.constant 0.0883883461 : f32
    %4 = vector.broadcast %cst : f32 to vector<1x128x128xf32>
    %5 = arith.mulf %3, %4 : vector<1x128x128xf32>
    %c0_3 = arith.constant 0 : index
    %c0_4 = arith.constant 0 : index
    %c0_5 = arith.constant 0 : index
    %6 = vector.load %arg4[%c0_3, %c0_4, %c0_5] : memref<1x256x128xf32, #tpu.memory_space<vmem>>, vector<1x256x128xf32>
    "tpu.trace_start"() <{level = 10 : i32, message = "bqd,bkd->bqk"}> : () -> ()
    %cst_6 = arith.constant dense<0.000000e+00> : vector<1x128x256xf32>
    %7 = tpu.matmul %5, %6, %cst_6 {dimension_numbers = #tpu.dot_dimension_numbers<[2], [2], [1], [1], [0, 0, 0, 1, 1, 1], [0], [0]>} : vector<1x128x128xf32>, vector<1x256x128xf32>, vector<1x128x256xf32> -> vector<1x128x256xf32>
    %c2_i32 = arith.constant 2 : i32
    "tpu.trace_stop"() : () -> ()
    %8 = arith.cmpi slt, %arg2, %c2_i32 : i32
    %9 = arith.extui %8 : i1 to i32
    %c0_i32_7 = arith.constant 0 : i32
    %10 = arith.cmpi ne, %9, %c0_i32_7 : i32
    scf.if %10 {
      %c0_11 = arith.constant 0 : index
      %c0_12 = arith.constant 0 : index
      %c0_13 = arith.constant 0 : index
      %17 = vector.load %arg8[%c0_11, %c0_12, %c0_13] : memref<1x128x1xf32, #tpu.memory_space<vmem>>, vector<1x128x1xf32>
      %cst_14 = arith.constant dense<0xFF800000> : vector<1x128xf32>
      %18 = vector.multi_reduction <maximumf>, %7, %cst_14 [2] : vector<1x128x256xf32> to vector<1x128xf32>
      %19 = vector.shape_cast %18 : vector<1x128xf32> to vector<1x128x1xf32>
      %20 = arith.maximumf %17, %19 : vector<1x128x1xf32>
      %c0_15 = arith.constant 0 : index
      %c0_16 = arith.constant 0 : index
      %c0_17 = arith.constant 0 : index
      %21 = vector.load %arg9[%c0_15, %c0_16, %c0_17] : memref<1x128x1xf32, #tpu.memory_space<vmem>>, vector<1x128x1xf32>
      %22 = arith.subf %17, %20 : vector<1x128x1xf32>
      %23 = math.exp %22 : vector<1x128x1xf32>
      %24 = arith.mulf %21, %23 : vector<1x128x1xf32>
      %25 = vector.broadcast %20 : vector<1x128x1xf32> to vector<1x128x256xf32>
      %26 = arith.subf %7, %25 : vector<1x128x256xf32>
      %27 = math.exp %26 : vector<1x128x256xf32>
      %cst_18 = arith.constant dense<0.000000e+00> : vector<1x128xf32>
      %28 = vector.multi_reduction <add>, %27, %cst_18 [2] : vector<1x128x256xf32> to vector<1x128xf32>
      %29 = vector.shape_cast %28 : vector<1x128xf32> to vector<1x128x1xf32>
      %30 = arith.addf %24, %29 : vector<1x128x1xf32>
      %c0_19 = arith.constant 0 : index
      %c0_20 = arith.constant 0 : index
      %c0_21 = arith.constant 0 : index
      %31 = vector.load %arg9[%c0_19, %c0_20, %c0_21] : memref<1x128x1xf32, #tpu.memory_space<vmem>>, vector<1x128x1xf32>
      tpu.vector_store %arg9[%c0_19, %c0_20, %c0_21], %30 {strides = array<i32>} : memref<1x128x1xf32, #tpu.memory_space<vmem>>, vector<1x128x1xf32>,
      %c0_22 = arith.constant 0 : index
      %c0_23 = arith.constant 0 : index
      %c0_24 = arith.constant 0 : index
      %32 = vector.load %arg8[%c0_22, %c0_23, %c0_24] : memref<1x128x1xf32, #tpu.memory_space<vmem>>, vector<1x128x1xf32>
      tpu.vector_store %arg8[%c0_22, %c0_23, %c0_24], %20 {strides = array<i32>} : memref<1x128x1xf32, #tpu.memory_space<vmem>>, vector<1x128x1xf32>,
    } else {
    }
    %c2_i32_8 = arith.constant 2 : i32
    %11 = arith.cmpi sge, %arg2, %c2_i32_8 : i32
    %12 = arith.extui %11 : i1 to i32
    %c0_i32_9 = arith.constant 0 : i32
    %13 = arith.cmpi ne, %12, %c0_i32_9 : i32
    scf.if %13 {
      %c0_11 = arith.constant 0 : index
      %c0_12 = arith.constant 0 : index
      %c0_13 = arith.constant 0 : index
      %17 = vector.load %arg9[%c0_11, %c0_12, %c0_13] : memref<1x128x1xf32, #tpu.memory_space<vmem>>, vector<1x128x1xf32>
      %18 = tpu.reciprocal %17 {approx = true} : vector<1x128x1xf32> -> vector<1x128x1xf32>
      %19 = arith.mulf %17, %18 : vector<1x128x1xf32>
      %cst_14 = arith.constant 2.000000e+00 : f32
      %20 = vector.broadcast %cst_14 : f32 to vector<1x128x1xf32>
      %21 = arith.subf %20, %19 : vector<1x128x1xf32>
      %22 = arith.mulf %18, %21 : vector<1x128x1xf32>
      %c0_15 = arith.constant 0 : index
      %c0_16 = arith.constant 0 : index
      %c0_17 = arith.constant 0 : index
      %23 = vector.load %arg8[%c0_15, %c0_16, %c0_17] : memref<1x128x1xf32, #tpu.memory_space<vmem>>, vector<1x128x1xf32>
      %24 = vector.broadcast %23 : vector<1x128x1xf32> to vector<1x128x256xf32>
      %25 = arith.subf %7, %24 : vector<1x128x256xf32>
      %26 = math.exp %25 : vector<1x128x256xf32>
      %27 = vector.broadcast %22 : vector<1x128x1xf32> to vector<1x128x256xf32>
      %28 = arith.mulf %26, %27 : vector<1x128x256xf32>
      %c0_18 = arith.constant 0 : index
      %c0_19 = arith.constant 0 : index
      %c0_20 = arith.constant 0 : index
      %29 = vector.load %arg7[%c0_18, %c0_19, %c0_20] : memref<1x128x256xf32, #tpu.memory_space<vmem>>, vector<1x128x256xf32>
      tpu.vector_store %arg7[%c0_18, %c0_19, %c0_20], %28 {strides = array<i32>} : memref<1x128x256xf32, #tpu.memory_space<vmem>>, vector<1x128x256xf32>,
      %c0_21 = arith.constant 0 : index
      %c0_22 = arith.constant 0 : index
      %c0_23 = arith.constant 0 : index
      %30 = vector.load %arg10[%c0_21, %c0_22, %c0_23] : memref<1x128x128xf32, #tpu.memory_space<vmem>>, vector<1x128x128xf32>
      %c0_24 = arith.constant 0 : index
      %c0_25 = arith.constant 0 : index
      %c0_26 = arith.constant 0 : index
      %31 = vector.load %arg5[%c0_24, %c0_25, %c0_26] : memref<1x256x128xf32, #tpu.memory_space<vmem>>, vector<1x256x128xf32>
      "tpu.trace_start"() <{level = 10 : i32, message = "bqk,bkd->bqd"}> : () -> ()
      %cst_27 = arith.constant dense<0.000000e+00> : vector<1x128x128xf32>
      %32 = tpu.matmul %28, %31, %cst_27 {dimension_numbers = #tpu.dot_dimension_numbers<[2], [1], [1], [2], [0, 0, 0, 1, 1, 2], [0], [0]>} : vector<1x128x256xf32>, vector<1x256x128xf32>, vector<1x128x128xf32> -> vector<1x128x128xf32>
      "tpu.trace_stop"() : () -> ()
      %33 = arith.addf %30, %32 : vector<1x128x128xf32>
      %c0_28 = arith.constant 0 : index
      %c0_29 = arith.constant 0 : index
      %c0_30 = arith.constant 0 : index
      %34 = vector.load %arg10[%c0_28, %c0_29, %c0_30] : memref<1x128x128xf32, #tpu.memory_space<vmem>>, vector<1x128x128xf32>
      tpu.vector_store %arg10[%c0_28, %c0_29, %c0_30], %33 {strides = array<i32>} : memref<1x128x128xf32, #tpu.memory_space<vmem>>, vector<1x128x128xf32>,
    } else {
    }
    %c3_i32 = arith.constant 3 : i32
    %14 = arith.cmpi eq, %arg2, %c3_i32 : i32
    %15 = arith.extui %14 : i1 to i32
    %c0_i32_10 = arith.constant 0 : i32
    %16 = arith.cmpi ne, %15, %c0_i32_10 : i32
    scf.if %16 {
      %c0_11 = arith.constant 0 : index
      %c0_12 = arith.constant 0 : index
      %c0_13 = arith.constant 0 : index
      %17 = vector.load %arg10[%c0_11, %c0_12, %c0_13] : memref<1x128x128xf32, #tpu.memory_space<vmem>>, vector<1x128x128xf32>
      %c0_14 = arith.constant 0 : index
      %c0_15 = arith.constant 0 : index
      %c0_16 = arith.constant 0 : index
      %18 = vector.load %arg6[%c0_14, %c0_15, %c0_16] : memref<1x128x128xf32, #tpu.memory_space<vmem>>, vector<1x128x128xf32>
      tpu.vector_store %arg6[%c0_14, %c0_15, %c0_16], %17 {strides = array<i32>} : memref<1x128x128xf32, #tpu.memory_space<vmem>>, vector<1x128x128xf32>,
    } else {
    }
    return
  }
  func.func @transform_0(%arg0: i32, %arg1: i32, %arg2: i32) -> (i32, i32, i32) {
    %c0_i32 = arith.constant 0 : i32
    %c0_i32_0 = arith.constant 0 : i32
    return %arg0, %arg1, %c0_i32 : i32, i32, i32
  }
  func.func @transform_1(%arg0: i32, %arg1: i32, %arg2: i32) -> (i32, i32, i32) {
    %c2_i32 = arith.constant 2 : i32
    %c0_i32 = arith.constant 0 : i32
    %0 = arith.cmpi eq, %c2_i32, %c0_i32 : i32
    %c1_i32 = arith.constant 1 : i32
    %1 = arith.select %0, %c1_i32, %c2_i32 : i32
    %2 = arith.remsi %arg2, %1 : i32
    %c0_i32_0 = arith.constant 0 : i32
    %3 = arith.cmpi ne, %2, %c0_i32_0 : i32
    %c0_i32_1 = arith.constant 0 : i32
    %4 = arith.cmpi slt, %2, %c0_i32_1 : i32
    %c0_i32_2 = arith.constant 0 : i32
    %5 = arith.cmpi slt, %1, %c0_i32_2 : i32
    %6 = arith.xori %4, %5 : i1
    %7 = arith.andi %6, %3 : i1
    %8 = arith.addi %2, %1 : i32
    %9 = arith.select %7, %8, %2 : i32
    %c0_i32_3 = arith.constant 0 : i32
    %c0_i32_4 = arith.constant 0 : i32
    return %arg0, %9, %c0_i32_3 : i32, i32, i32
  }
  func.func @transform_2(%arg0: i32, %arg1: i32, %arg2: i32) -> (i32, i32, i32) {
    %c2_i32 = arith.constant 2 : i32
    %0 = arith.subi %arg2, %c2_i32 : i32
    %c0_i32 = arith.constant 0 : i32
    %1 = arith.maxsi %0, %c0_i32 : i32
    %c0_i32_0 = arith.constant 0 : i32
    %c0_i32_1 = arith.constant 0 : i32
    return %arg0, %1, %c0_i32_0 : i32, i32, i32
  }
  func.func @transform_3(%arg0: i32, %arg1: i32, %arg2: i32) -> (i32, i32, i32) {
    %c0_i32 = arith.constant 0 : i32
    %c0_i32_0 = arith.constant 0 : i32
    return %arg0, %arg1, %c0_i32 : i32, i32, i32
  }
  func.func @transform_4(%arg0: i32, %arg1: i32, %arg2: i32) -> (i32, i32, i32) {
    %c2_i32 = arith.constant 2 : i32
    %0 = arith.subi %arg2, %c2_i32 : i32
    %c0_i32 = arith.constant 0 : i32
    %1 = arith.maxsi %0, %c0_i32 : i32
    %c0_i32_0 = arith.constant 0 : i32
    return %arg0, %arg1, %1 : i32, i32, i32
  }
}

</mosaic_0001>

<llo_original>
// kernel: tpu_custom_call.1
$region0: #{tpu_custom_call.1}
  #allocation0 [shape = 'u32[]', space=smem, size = 0x4, offset = 0x4, fixed_abs, tag = 'smem constant byte address 0x4 - core index']
  #allocation1 [shape = 'u32[144,128]{1,0:T(1,128)}', space=vmem, size = 0x12000, scoped, tag = 'internal scratch']
  #allocation2 [shape = 'f32[1,128,1]{2,1,0:T(8,128)}', space=vmem, size = 0x10000, scoped, tag = 'scratch operand']
  #allocation3 [shape = 'f32[1,128,1]{2,1,0:T(8,128)}', space=vmem, size = 0x10000, scoped, tag = 'scratch operand']
  #allocation4 [shape = 'f32[1,128,128]{2,1,0:T(8,128)}', space=vmem, size = 0x10000, scoped, tag = 'scratch operand']
  %s0 = inlined_call_operand.hbm [shape: f32[2,256,128], index: 0, kind: input, shape index: {}]
  %s1 = inlined_call_operand.hbm [shape: f32[2,512,128], index: 1, kind: input, shape index: {}]
  %s2 = inlined_call_operand.hbm [shape: f32[2,512,128], index: 2, kind: input, shape index: {}]
  %s3 = inlined_call_operand.hbm [shape: f32[2,256,128], index: 3, kind: output, shape index: {0}]
  %s4 = inlined_call_operand.hbm [shape: f32[2,256,512], index: 4, kind: output, shape index: {1}]
  %5 = xla_tuple %s3, %s4
  %s6 = sld [smem:[#allocation0]]
  $region81: #{tpu_custom_call.1} parent=0
    _
  %s8 = ssub.s32 1, %s6
  %s9 = scalar_select 0, %s8, %s6
  $region1: #{tpu_custom_call.1} parent=0
    #allocation5 [shape = 'u8[131072]{0}', space=vmem, size = 0x20000, scoped, tag = 'input window, operand 0']
    #allocation6 [shape = 's32[2]{0}', space=sflag, size = 0x8, scoped, tag = 'scoped memory for tpu_custom_call.1']
    #allocation7 [shape = 's32[2]{0}', space=sflag, size = 0x8, scoped, tag = 'scoped memory for tpu_custom_call.1']
    #allocation8 [shape = 'u8[262144]{0}', space=vmem, size = 0x40000, scoped, tag = 'input window, operand 1']
    #allocation9 [shape = 's32[2]{0}', space=sflag, size = 0x8, scoped, tag = 'scoped memory for tpu_custom_call.1']
    #allocation10 [shape = 'u8[262144]{0}', space=vmem, size = 0x40000, scoped, tag = 'input window, operand 2']
    #allocation11 [shape = 'u8[131072]{0}', space=vmem, size = 0x20000, scoped, tag = 'output window, operand 0']
    #allocation12 [shape = 'u8[262144]{0}', space=vmem, size = 0x40000, scoped, tag = 'output window, operand 1']
    #allocation13 [shape = 's32[2]{0}', space=sflag, size = 0x8, scoped, tag = 'scoped memory for tpu_custom_call.1']
    %10 = vsyncpa [#allocation6], 0
    %s11 = scalar_lea.sflag [#allocation6], 1
    %12 = vsyncpa %s11, 0
    %13 = vsyncpa [#allocation9], 0
    %s14 = scalar_lea.sflag [#allocation9], 1
    %15 = vsyncpa %s14, 0
    %16 = vsyncpa [#allocation7], 0
    %s17 = scalar_lea.sflag [#allocation7], 1
    %18 = vsyncpa %s17, 0
    %19 = vsyncpa [#allocation13], 0
    %s20 = scalar_lea.sflag [#allocation13], 1
    %21 = vsyncpa %s20, 0
    loop: start=0, step=1, limit=18
    $region2: #{tpu_custom_call.1} parent=1 // loop_pre_header
      _
    $region3: #{tpu_custom_call.1} parent=1 // loop_header
      %s23 = sphi 0, %s27
      %p24 = scmp.ge.s32.totalorder %s23, 18
      %s30 = sphi 0, %s49
      %s31 = sphi 0, %s45
      %s32 = sphi 0, %s41
      %s33 = sphi 0, %s30
      %s34 = sphi 0, %s31
      %s35 = sphi 0, %s32
      %s36 = sphi 0, %s33
      %s37 = sphi 0, %s34
      %s38 = sphi 0, %s35
      %s54 = sphi 0, %s56
      %s57 = sphi 0, %s54
      %s58 = sphi 0, %s57
      %s74 = sphi 0, %s58
      %s106 = sphi 0, %s108
      %s109 = sphi 0, %s106
      %s110 = sphi 0, %s109
      %s126 = sphi 0, %s110
      %s140 = sphi 0, %s142
      %s143 = sphi 0, %s140
      %s144 = sphi 0, %s143
      %s160 = sphi 0, %s144
      %s168 = sphi 0, %s170
      %s171 = sphi 0, %s168
      %s172 = sphi 0, %s171
      %s188 = sphi 0, %s172
      %s204 = sphi 0, %s206
      %s207 = sphi 0, %s204
      %s208 = sphi 0, %s207
      %s224 = sphi 0, %s208
    $region4: #{tpu_custom_call.1} parent=1 // loop_header_branch
      %26 = sbr.rel (%p24) target = $region8
    $region5: #{tpu_custom_call.1} parent=1 // loop_body
      %s28 = ssub.s32 %s23, 1
      %s29 = ssub.s32 %s23, 2
      %s39 = sadd.s32 1, %s32
      %p40 = scmp.ge.s32.totalorder %s39, 4
      %s41 = scalar_select %p40, 0, %s39
      %s42 = sadd.s32 1, %s31
      %s43 = scalar_select %p40, %s42, %s31
      %p44 = scmp.ge.s32.totalorder %s43, 2
      %s45 = scalar_select %p44, 0, %s43
      %s46 = sadd.s32 1, %s30
      %s47 = scalar_select %p44, %s46, %s30
      %p48 = scmp.ge.s32.totalorder %s47, 2
      %s49 = scalar_select %p48, 0, %s47
      %s50 = ssub.s32 %s30, %s49
      %s51 = ssub.s32 %s31, %s45
      %s52 = sor.u32 %s50, %s51
      %p53 = scmp.eq.s32.totalorder %s52, 0
      %s55 = sadd.s32 %s54, 1
      %s56 = scalar_select %p53, %s54, %s55
      %p59 = pneg %p53
      %p60 = scmp.eq.s32.totalorder %s23, 15
      %p61 = por %p59, %p60
      %p62 = scmp.ne.s32.totalorder %s54, %s57
      %p63 = scmp.eq.s32.totalorder %s23, 0
      %p64 = por %p62, %p63
      %p65 = scmp.ne.s32.totalorder %s54, %s57
      %p66 = scmp.eq.s32.totalorder %s28, 15
      %p67 = por %p65, %p66
      %p68 = scmp.ne.s32.totalorder %s57, %s58
      %p69 = scmp.eq.s32.totalorder %s28, 0
      %p70 = por %p68, %p69
      %p71 = scmp.ne.s32.totalorder %s57, %s58
      %p72 = scmp.eq.s32.totalorder %s29, 15
      %p73 = por %p71, %p72
      %p75 = scmp.ne.s32.totalorder %s58, %s74
      %p76 = scmp.eq.s32.totalorder %s29, 0
      %p77 = por %p75, %p76
      %p78 = scmp.lt.s32.totalorder %s32, 0
      %s79 = ssub.s32 0, %s32
      %s80 = scalar_select %p78, %s79, %s32
      %s81 = sand.u32 %s80, 1
      %s82 = ssub.s32 0, %s81
      %s83 = scalar_select %p78, %s82, %s81
      %p84 = scmp.ne.s32.totalorder %s83, 0
      %p85 = scmp.lt.s32.totalorder %s83, 0
      %p86 = pnand %p85, %p84
      %p87 = pneg %p86
      %s88 = sadd.s32 %s83, 2
      %s89 = scalar_select %p87, %s88, %s83
      %p90 = scmp.lt.s32.totalorder %s41, 0
      %s91 = ssub.s32 0, %s41
      %s92 = scalar_select %p90, %s91, %s41
      %s93 = sand.u32 %s92, 1
      %s94 = ssub.s32 0, %s93
      %s95 = scalar_select %p90, %s94, %s93
      %p96 = scmp.ne.s32.totalorder %s95, 0
      %p97 = scmp.lt.s32.totalorder %s95, 0
      %p98 = pnand %p97, %p96
      %p99 = pneg %p98
      %s100 = sadd.s32 %s95, 2
      %s101 = scalar_select %p99, %s100, %s95
      %s102 = ssub.s32 %s30, %s49
      %s103 = ssub.s32 %s89, %s101
      %s104 = sor.u32 %s102, %s103
      %p105 = scmp.eq.s32.totalorder %s104, 0
      %s107 = sadd.s32 %s106, 1
      %s108 = scalar_select %p105, %s106, %s107
      %p111 = pneg %p105
      %p112 = scmp.eq.s32.totalorder %s23, 15
      %p113 = por %p111, %p112
      %p114 = scmp.ne.s32.totalorder %s106, %s109
      %p115 = scmp.eq.s32.totalorder %s23, 0
      %p116 = por %p114, %p115
      %p117 = scmp.ne.s32.totalorder %s106, %s109
      %p118 = scmp.eq.s32.totalorder %s28, 15
      %p119 = por %p117, %p118
      %p120 = scmp.ne.s32.totalorder %s109, %s110
      %p121 = scmp.eq.s32.totalorder %s28, 0
      %p122 = por %p120, %p121
      %p123 = scmp.ne.s32.totalorder %s109, %s110
      %p124 = scmp.eq.s32.totalorder %s29, 15
      %p125 = por %p123, %p124
      %p127 = scmp.ne.s32.totalorder %s110, %s126
      %p128 = scmp.eq.s32.totalorder %s29, 0
      %p129 = por %p127, %p128
      %s130 = ssub.s32 %s32, 2
      %p131 = scmp.gt.s32.totalorder %s130, 0
      %s132 = scalar_select %p131, %s130, 0
      %s133 = ssub.s32 %s41, 2
      %p134 = scmp.gt.s32.totalorder %s133, 0
      %s135 = scalar_select %p134, %s133, 0
      %s136 = ssub.s32 %s30, %s49
      %s137 = ssub.s32 %s132, %s135
      %s138 = sor.u32 %s136, %s137
      %p139 = scmp.eq.s32.totalorder %s138, 0
      %s141 = sadd.s32 %s140, 1
      %s142 = scalar_select %p139, %s140, %s141
      %p145 = pneg %p139
      %p146 = scmp.eq.s32.totalorder %s23, 15
      %p147 = por %p145, %p146
      %p148 = scmp.ne.s32.totalorder %s140, %s143
      %p149 = scmp.eq.s32.totalorder %s23, 0
      %p150 = por %p148, %p149
      %p151 = scmp.ne.s32.totalorder %s140, %s143
      %p152 = scmp.eq.s32.totalorder %s28, 15
      %p153 = por %p151, %p152
      %p154 = scmp.ne.s32.totalorder %s143, %s144
      %p155 = scmp.eq.s32.totalorder %s28, 0
      %p156 = por %p154, %p155
      %p157 = scmp.ne.s32.totalorder %s143, %s144
      %p158 = scmp.eq.s32.totalorder %s29, 15
      %p159 = por %p157, %p158
      %p161 = scmp.ne.s32.totalorder %s144, %s160
      %p162 = scmp.eq.s32.totalorder %s29, 0
      %p163 = por %p161, %p162
      %s164 = ssub.s32 %s30, %s49
      %s165 = ssub.s32 %s31, %s45
      %s166 = sor.u32 %s164, %s165
      %p167 = scmp.eq.s32.totalorder %s166, 0
      %s169 = sadd.s32 %s168, 1
      %s170 = scalar_select %p167, %s168, %s169
      %p173 = pneg %p167
      %p174 = scmp.eq.s32.totalorder %s23, 15
      %p175 = por %p173, %p174
      %p176 = scmp.ne.s32.totalorder %s168, %s171
      %p177 = scmp.eq.s32.totalorder %s23, 0
      %p178 = por %p176, %p177
      %p179 = scmp.ne.s32.totalorder %s168, %s171
      %p180 = scmp.eq.s32.totalorder %s28, 15
      %p181 = por %p179, %p180
      %p182 = scmp.ne.s32.totalorder %s171, %s172
      %p183 = scmp.eq.s32.totalorder %s28, 0
      %p184 = por %p182, %p183
      %p185 = scmp.ne.s32.totalorder %s171, %s172
      %p186 = scmp.eq.s32.totalorder %s29, 15
      %p187 = por %p185, %p186
      %p189 = scmp.ne.s32.totalorder %s172, %s188
      %p190 = scmp.eq.s32.totalorder %s29, 0
      %p191 = por %p189, %p190
      %s192 = ssub.s32 %s32, 2
      %p193 = scmp.gt.s32.totalorder %s192, 0
      %s194 = scalar_select %p193, %s192, 0
      %s195 = ssub.s32 %s41, 2
      %p196 = scmp.gt.s32.totalorder %s195, 0
      %s197 = scalar_select %p196, %s195, 0
      %s198 = ssub.s32 %s30, %s49
      %s199 = ssub.s32 %s31, %s45
      %s200 = sor.u32 %s198, %s199
      %s201 = ssub.s32 %s194, %s197
      %s202 = sor.u32 %s200, %s201
      %p203 = scmp.eq.s32.totalorder %s202, 0
      %s205 = sadd.s32 %s204, 1
      %s206 = scalar_select %p203, %s204, %s205
      %p209 = pneg %p203
      %p210 = scmp.eq.s32.totalorder %s23, 15
      %p211 = por %p209, %p210
      %p212 = scmp.ne.s32.totalorder %s204, %s207
      %p213 = scmp.eq.s32.totalorder %s23, 0
      %p214 = por %p212, %p213
      %p215 = scmp.ne.s32.totalorder %s204, %s207
      %p216 = scmp.eq.s32.totalorder %s28, 15
      %p217 = por %p215, %p216
      %p218 = scmp.ne.s32.totalorder %s207, %s208
      %p219 = scmp.eq.s32.totalorder %s28, 0
      %p220 = por %p218, %p219
      %p221 = scmp.ne.s32.totalorder %s207, %s208
      %p222 = scmp.eq.s32.totalorder %s29, 15
      %p223 = por %p221, %p222
      %p225 = scmp.ne.s32.totalorder %s208, %s224
      %p226 = scmp.eq.s32.totalorder %s29, 0
      %p227 = por %p225, %p226
      %p228 = scmp.le.s32.totalorder 1, %s23
      %p229 = scmp.lt.s32.totalorder %s23, 17
      %p230 = pnand %p228, %p229
      %p231 = pneg %p230
      // Predicated region
      $region9: #{tpu_custom_call.1} parent=5 // pred_check
        _
      $region10: #{tpu_custom_call.1} parent=5 // pred_check_branch
        %233 = sbr.rel (%p230) target = $region12
      $region11: #{tpu_custom_call.1} parent=5 // pred_region
        %s234 = ssub.s32 %s23, 1
      $region12: #{tpu_custom_call.1} parent=5 // pred_fallthru
        _
      %p235 = scmp.lt.s32.totalorder %s23, 16
      // Predicated region
      $region13: #{tpu_custom_call.1} parent=5 // pred_check
        %p236 = pneg %p235
      $region14: #{tpu_custom_call.1} parent=5 // pred_check_branch
        %238 = sbr.rel (%p236) target = $region16
      $region15: #{tpu_custom_call.1} parent=5 // pred_region
        // Predicated region
        $region17: #{tpu_custom_call.1} parent=15 // pred_check
          %p239 = pneg %p64
        $region18: #{tpu_custom_call.1} parent=15 // pred_check_branch
          %241 = sbr.rel (%p239) target = $region20
        $region19: #{tpu_custom_call.1} parent=15 // pred_region
          %s242 = sand.u32 %s54, 1
          %s243 = scalar_lea.sflag [#allocation6], %s242
          %s244 = sand.u32 %s54, 1
          %s245 = smul.addr %s244, 128
          %s246 = scalar_lea.vmem [#allocation5], %s245
          %s247 = smul.u32 16, %s31
          %s249 = ssub.s32 2048, 2048
          %250 = vsyncadd %s243, %s249
          %s251 = smul.addr %s30, 32
          %s252 = sadd.s32 %s247, %s251
          %s253 = smul.addr %s252, 128
          %s254 = scalar_lea.hbm %s0, %s253
          %s255 = sshll.u32 %s246, 4
          %s256 = int_to_ptr.vmem [resolvable:$true] %s255
          %261 = dma.hbm_to_vmem [thread:$0]  %s254, 2048, %s256, %s243, 128, 128, 8
        $region20: #{tpu_custom_call.1} parent=15 // pred_fallthru
          _
        // Predicated region
        $region21: #{tpu_custom_call.1} parent=15 // pred_check
          %p262 = pneg %p116
        $region22: #{tpu_custom_call.1} parent=15 // pred_check_branch
          %264 = sbr.rel (%p262) target = $region24
        $region23: #{tpu_custom_call.1} parent=15 // pred_region
          %s265 = sand.u32 %s23, 1
          %s266 = scalar_lea.sflag [#allocation9], %s265
          %s267 = sand.u32 %s106, 1
          %s268 = smul.addr %s267, 256
          %s269 = scalar_lea.vmem [#allocation8], %s268
          %p270 = scmp.lt.s32.totalorder %s32, 0
          %s271 = ssub.s32 0, %s32
          %s272 = scalar_select %p270, %s271, %s32
          %s273 = sand.u32 %s272, 1
          %s274 = ssub.s32 0, %s273
          %s275 = scalar_select %p270, %s274, %s273
          %p276 = scmp.ne.s32.totalorder %s275, 0
          %p277 = scmp.lt.s32.totalorder %s275, 0
          %p278 = pnand %p277, %p276
          %p279 = pneg %p278
          %s280 = sadd.s32 %s275, 2
          %s281 = scalar_select %p279, %s280, %s275
          %s282 = smul.u32 32, %s281
          %s284 = ssub.s32 4096, 4096
          %285 = vsyncadd %s266, %s284
          %s286 = smul.addr %s30, 64
          %s287 = sadd.s32 %s282, %s286
          %s288 = smul.addr %s287, 128
          %s289 = scalar_lea.hbm %s1, %s288
          %s290 = sshll.u32 %s269, 4
          %s291 = int_to_ptr.vmem [resolvable:$true] %s290
          %296 = dma.hbm_to_vmem [thread:$0]  %s289, 4096, %s291, %s266, 128, 128, 8
        $region24: #{tpu_custom_call.1} parent=15 // pred_fallthru
          _
        // Predicated region
        $region25: #{tpu_custom_call.1} parent=15 // pred_check
          %p297 = pneg %p150
        $region26: #{tpu_custom_call.1} parent=15 // pred_check_branch
          %299 = sbr.rel (%p297) target = $region28
        $region27: #{tpu_custom_call.1} parent=15 // pred_region
          %s300 = sand.u32 %s23, 1
          %s301 = scalar_lea.sflag [#allocation9], %s300
          %s302 = sand.u32 %s140, 1
          %s303 = smul.addr %s302, 256
          %s304 = scalar_lea.vmem [#allocation10], %s303
          %s305 = ssub.s32 %s32, 2
          %p306 = scmp.gt.s32.totalorder %s305, 0
          %s307 = scalar_select %p306, %s305, 0
          %s308 = smul.u32 32, %s307
          %s310 = ssub.s32 4096, 4096
          %311 = vsyncadd %s301, %s310
          %s312 = smul.addr %s30, 64
          %s313 = sadd.s32 %s308, %s312
          %s314 = smul.addr %s313, 128
          %s315 = scalar_lea.hbm %s2, %s314
          %s316 = sshll.u32 %s304, 4
          %s317 = int_to_ptr.vmem [resolvable:$true] %s316
          %322 = dma.hbm_to_vmem [thread:$0]  %s315, 4096, %s317, %s301, 128, 128, 8
        $region28: #{tpu_custom_call.1} parent=15 // pred_fallthru
          _
      $region16: #{tpu_custom_call.1} parent=5 // pred_fallthru
        _
      %p323 = scmp.le.s32.totalorder 1, %s23
      %p324 = scmp.lt.s32.totalorder %s23, 17
      %p325 = pnand %p323, %p324
      %p326 = pneg %p325
      // Predicated region
      $region29: #{tpu_custom_call.1} parent=5 // pred_check
        _
      $region30: #{tpu_custom_call.1} parent=5 // pred_check_branch
        %328 = sbr.rel (%p325) target = $region32
      $region31: #{tpu_custom_call.1} parent=5 // pred_region
        %s329 = ssub.s32 %s23, 1
        %s330 = sand.u32 %s57, 1
        %s331 = scalar_lea.sflag [#allocation6], %s330
        %s332 = sand.u32 %s57, 1
        %s333 = smul.addr %s332, 128
        %s334 = scalar_lea.vmem [#allocation5], %s333
        // Predicated region
        $region33: #{tpu_custom_call.1} parent=31 // pred_check
          %p335 = pneg %p70
        $region34: #{tpu_custom_call.1} parent=31 // pred_check_branch
          %337 = sbr.rel (%p335) target = $region36
        $region35: #{tpu_custom_call.1} parent=31 // pred_region
          %338 = dma.done %s331, 2048
        $region36: #{tpu_custom_call.1} parent=31 // pred_fallthru
          _
        %s339 = sand.u32 %s28, 1
        %s340 = scalar_lea.sflag [#allocation9], %s339
        %s341 = sand.u32 %s109, 1
        %s342 = smul.addr %s341, 256
        %s343 = scalar_lea.vmem [#allocation8], %s342
        // Predicated region
        $region37: #{tpu_custom_call.1} parent=31 // pred_check
          %p344 = pneg %p122
        $region38: #{tpu_custom_call.1} parent=31 // pred_check_branch
          %346 = sbr.rel (%p344) target = $region40
        $region39: #{tpu_custom_call.1} parent=31 // pred_region
          %347 = dma.done %s340, 4096
        $region40: #{tpu_custom_call.1} parent=31 // pred_fallthru
          _
        %s348 = sand.u32 %s28, 1
        %s349 = scalar_lea.sflag [#allocation9], %s348
        %s350 = sand.u32 %s143, 1
        %s351 = smul.addr %s350, 256
        %s352 = scalar_lea.vmem [#allocation10], %s351
        // Predicated region
        $region41: #{tpu_custom_call.1} parent=31 // pred_check
          %p353 = pneg %p156
        $region42: #{tpu_custom_call.1} parent=31 // pred_check_branch
          %355 = sbr.rel (%p353) target = $region44
        $region43: #{tpu_custom_call.1} parent=31 // pred_region
          %356 = dma.done %s349, 4096
        $region44: #{tpu_custom_call.1} parent=31 // pred_fallthru
          _
        %s357 = sand.u32 %s57, 1
        %s358 = scalar_lea.sflag [#allocation6], %s357
        %s359 = sand.u32 %s57, 1
        %s360 = smul.addr %s359, 128
        %s361 = scalar_lea.vmem [#allocation5], %s360
        %p362 = pneg %p70
        %p363 = pneg %p67
        %s364 = sand.u32 %s28, 1
        %s365 = scalar_lea.sflag [#allocation9], %s364
        %s366 = sand.u32 %s109, 1
        %s367 = smul.addr %s366, 256
        %s368 = scalar_lea.vmem [#allocation8], %s367
        %p369 = pneg %p122
        %p370 = pneg %p119
        %s371 = sand.u32 %s28, 1
        %s372 = scalar_lea.sflag [#allocation9], %s371
        %s373 = sand.u32 %s143, 1
        %s374 = smul.addr %s373, 256
        %s375 = scalar_lea.vmem [#allocation10], %s374
        %p376 = pneg %p156
        %p377 = pneg %p153
        %p378 = pneg %p184
        %p379 = pneg %p181
        %s380 = sand.u32 %s171, 1
        %s381 = scalar_lea.sflag [#allocation7], %s380
        %s382 = sand.u32 %s171, 1
        %s383 = smul.addr %s382, 128
        %s384 = scalar_lea.vmem [#allocation11], %s383
        %p385 = pneg %p220
        %p386 = pneg %p217
        %s387 = sand.u32 %s207, 1
        %s388 = scalar_lea.sflag [#allocation13], %s387
        %s389 = sand.u32 %s207, 1
        %s390 = smul.addr %s389, 256
        %s391 = scalar_lea.vmem [#allocation12], %s390
        %s392 = smul.u32 16, %s34
        %p393 = scmp.lt.s32.totalorder %s35, 0
        %s394 = ssub.s32 0, %s35
        %s395 = scalar_select %p393, %s394, %s35
        %s396 = sand.u32 %s395, 1
        %s397 = ssub.s32 0, %s396
        %s398 = scalar_select %p393, %s397, %s396
        %p399 = scmp.ne.s32.totalorder %s398, 0
        %p400 = scmp.lt.s32.totalorder %s398, 0
        %p401 = pnand %p400, %p399
        %p402 = pneg %p401
        %s403 = sadd.s32 %s398, 2
        %s404 = scalar_select %p402, %s403, %s398
        %s405 = smul.u32 32, %s404
        %s406 = ssub.s32 %s35, 2
        %p407 = scmp.gt.s32.totalorder %s406, 0
        %s408 = scalar_select %p407, %s406, 0
        %s409 = smul.u32 32, %s408
        %s410 = smul.u32 16, %s34
        %s411 = ssub.s32 %s35, 2
        %p412 = scmp.gt.s32.totalorder %s411, 0
        %s413 = scalar_select %p412, %s411, 0
        %s414 = smul.u32 16, %s34
        %s415 = smul.u32 2, %s413
        %p416 = scmp.eq.s32.totalorder %s35, 0
        // Predicated region
        $region45: #{tpu_custom_call.1} parent=31 // pred_check
          %p417 = pneg %p416
        $region46: #{tpu_custom_call.1} parent=31 // pred_check_branch
          %419 = sbr.rel (%p417) target = $region48
        $region47: #{tpu_custom_call.1} parent=31 // pred_region
          %vm420 = vcmask 7168
          %421 = vst.msk [vmem:[#allocation2] sm:$0xff] %vm420, -inf
          %422 = vst.msk [vmem:[#allocation2 + $0x8] sm:$0xff] %vm420, -inf
          %423 = vst.msk [vmem:[#allocation2 + $0x10] sm:$0xff] %vm420, -inf
          %424 = vst.msk [vmem:[#allocation2 + $0x18] sm:$0xff] %vm420, -inf
          %425 = vst.msk [vmem:[#allocation2 + $0x20] sm:$0xff] %vm420, -inf
          %426 = vst.msk [vmem:[#allocation2 + $0x28] sm:$0xff] %vm420, -inf
          %427 = vst.msk [vmem:[#allocation2 + $0x30] sm:$0xff] %vm420, -inf
          %428 = vst.msk [vmem:[#allocation2 + $0x38] sm:$0xff] %vm420, -inf
          %429 = vst.msk [vmem:[#allocation2 + $0x40] sm:$0xff] %vm420, -inf
          %430 = vst.msk [vmem:[#allocation2 + $0x48] sm:$0xff] %vm420, -inf
          %431 = vst.msk [vmem:[#allocation2 + $0x50] sm:$0xff] %vm420, -inf
          %432 = vst.msk [vmem:[#allocation2 + $0x58] sm:$0xff] %vm420, -inf
          %433 = vst.msk [vmem:[#allocation2 + $0x60] sm:$0xff] %vm420, -inf
          %434 = vst.msk [vmem:[#allocation2 + $0x68] sm:$0xff] %vm420, -inf
          %435 = vst.msk [vmem:[#allocation2 + $0x70] sm:$0xff] %vm420, -inf
          %436 = vst.msk [vmem:[#allocation2 + $0x78] sm:$0xff] %vm420, -inf
          %437 = vst.msk [vmem:[#allocation3] sm:$0xff] %vm420, 0.0
          %438 = vst.msk [vmem:[#allocation3 + $0x8] sm:$0xff] %vm420, 0.0
          %439 = vst.msk [vmem:[#allocation3 + $0x10] sm:$0xff] %vm420, 0.0
          %440 = vst.msk [vmem:[#allocation3 + $0x18] sm:$0xff] %vm420, 0.0
          %441 = vst.msk [vmem:[#allocation3 + $0x20] sm:$0xff] %vm420, 0.0
          %442 = vst.msk [vmem:[#allocation3 + $0x28] sm:$0xff] %vm420, 0.0
          %443 = vst.msk [vmem:[#allocation3 + $0x30] sm:$0xff] %vm420, 0.0
          %444 = vst.msk [vmem:[#allocation3 + $0x38] sm:$0xff] %vm420, 0.0
          %445 = vst.msk [vmem:[#allocation3 + $0x40] sm:$0xff] %vm420, 0.0
          %446 = vst.msk [vmem:[#allocation3 + $0x48] sm:$0xff] %vm420, 0.0
          %447 = vst.msk [vmem:[#allocation3 + $0x50] sm:$0xff] %vm420, 0.0
          %448 = vst.msk [vmem:[#allocation3 + $0x58] sm:$0xff] %vm420, 0.0
          %449 = vst.msk [vmem:[#allocation3 + $0x60] sm:$0xff] %vm420, 0.0
          %450 = vst.msk [vmem:[#allocation3 + $0x68] sm:$0xff] %vm420, 0.0
          %451 = vst.msk [vmem:[#allocation3 + $0x70] sm:$0xff] %vm420, 0.0
          %452 = vst.msk [vmem:[#allocation3 + $0x78] sm:$0xff] %vm420, 0.0
          %453 = vst [vmem:[#allocation4] sm:$0xff] 0.0
          %454 = vst [vmem:[#allocation4 + $0x8] sm:$0xff] 0.0
          %455 = vst [vmem:[#allocation4 + $0x10] sm:$0xff] 0.0
          %456 = vst [vmem:[#allocation4 + $0x18] sm:$0xff] 0.0
          %457 = vst [vmem:[#allocation4 + $0x20] sm:$0xff] 0.0
          %458 = vst [vmem:[#allocation4 + $0x28] sm:$0xff] 0.0
          %459 = vst [vmem:[#allocation4 + $0x30] sm:$0xff] 0.0
          %460 = vst [vmem:[#allocation4 + $0x38] sm:$0xff] 0.0
          %461 = vst [vmem:[#allocation4 + $0x40] sm:$0xff] 0.0
          %462 = vst [vmem:[#allocation4 + $0x48] sm:$0xff] 0.0
          %463 = vst [vmem:[#allocation4 + $0x50] sm:$0xff] 0.0
          %464 = vst [vmem:[#allocation4 + $0x58] sm:$0xff] 0.0
          %465 = vst [vmem:[#allocation4 + $0x60] sm:$0xff] 0.0
          %466 = vst [vmem:[#allocation4 + $0x68] sm:$0xff] 0.0
          %467 = vst [vmem:[#allocation4 + $0x70] sm:$0xff] 0.0
          %468 = vst [vmem:[#allocation4 + $0x78] sm:$0xff] 0.0
        $region48: #{tpu_custom_call.1} parent=31 // pred_fallthru
          _
        %v469 = vld [vmem:[%s334] sm:$0xff]
        %v470 = vld [vmem:[%s334 + $0x8] sm:$0xff]
        %v471 = vld [vmem:[%s334 + $0x10] sm:$0xff]
        %v472 = vld [vmem:[%s334 + $0x18] sm:$0xff]
        %v473 = vld [vmem:[%s334 + $0x20] sm:$0xff]
        %v474 = vld [vmem:[%s334 + $0x28] sm:$0xff]
        %v475 = vld [vmem:[%s334 + $0x30] sm:$0xff]
        %v476 = vld [vmem:[%s334 + $0x38] sm:$0xff]
        %v477 = vld [vmem:[%s334 + $0x40] sm:$0xff]
        %v478 = vld [vmem:[%s334 + $0x48] sm:$0xff]
        %v479 = vld [vmem:[%s334 + $0x50] sm:$0xff]
        %v480 = vld [vmem:[%s334 + $0x58] sm:$0xff]
        %v481 = vld [vmem:[%s334 + $0x60] sm:$0xff]
        %v482 = vld [vmem:[%s334 + $0x68] sm:$0xff]
        %v483 = vld [vmem:[%s334 + $0x70] sm:$0xff]
        %v484 = vld [vmem:[%s334 + $0x78] sm:$0xff]
        %v485 = vmul.f32 %v469, 0.088388346
        %v486 = vmul.f32 %v470, 0.088388346
        %v487 = vmul.f32 %v471, 0.088388346
        %v488 = vmul.f32 %v472, 0.088388346
        %v489 = vmul.f32 %v473, 0.088388346
        %v490 = vmul.f32 %v474, 0.088388346
        %v491 = vmul.f32 %v475, 0.088388346
        %v492 = vmul.f32 %v476, 0.088388346
        %v493 = vmul.f32 %v477, 0.088388346
        %v494 = vmul.f32 %v478, 0.088388346
        %v495 = vmul.f32 %v479, 0.088388346
        %v496 = vmul.f32 %v480, 0.088388346
        %v497 = vmul.f32 %v481, 0.088388346
        %v498 = vmul.f32 %v482, 0.088388346
        %v499 = vmul.f32 %v483, 0.088388346
        %v500 = vmul.f32 %v484, 0.088388346
        %v501 = vld [vmem:[%s343] sm:$0xff]
        %v502 = vld [vmem:[%s343 + $0x8] sm:$0xff]
        %v503 = vld [vmem:[%s343 + $0x10] sm:$0xff]
        %v504 = vld [vmem:[%s343 + $0x18] sm:$0xff]
        %v505 = vld [vmem:[%s343 + $0x20] sm:$0xff]
        %v506 = vld [vmem:[%s343 + $0x28] sm:$0xff]
        %v507 = vld [vmem:[%s343 + $0x30] sm:$0xff]
        %v508 = vld [vmem:[%s343 + $0x38] sm:$0xff]
        %v509 = vld [vmem:[%s343 + $0x40] sm:$0xff]
        %v510 = vld [vmem:[%s343 + $0x48] sm:$0xff]
        %v511 = vld [vmem:[%s343 + $0x50] sm:$0xff]
        %v512 = vld [vmem:[%s343 + $0x58] sm:$0xff]
        %v513 = vld [vmem:[%s343 + $0x60] sm:$0xff]
        %v514 = vld [vmem:[%s343 + $0x68] sm:$0xff]
        %v515 = vld [vmem:[%s343 + $0x70] sm:$0xff]
        %v516 = vld [vmem:[%s343 + $0x78] sm:$0xff]
        %v517 = vld [vmem:[%s343 + $0x80] sm:$0xff]
        %v518 = vld [vmem:[%s343 + $0x88] sm:$0xff]
        %v519 = vld [vmem:[%s343 + $0x90] sm:$0xff]
        %v520 = vld [vmem:[%s343 + $0x98] sm:$0xff]
        %v521 = vld [vmem:[%s343 + $0xa0] sm:$0xff]
        %v522 = vld [vmem:[%s343 + $0xa8] sm:$0xff]
        %v523 = vld [vmem:[%s343 + $0xb0] sm:$0xff]
        %v524 = vld [vmem:[%s343 + $0xb8] sm:$0xff]
        %v525 = vld [vmem:[%s343 + $0xc0] sm:$0xff]
        %v526 = vld [vmem:[%s343 + $0xc8] sm:$0xff]
        %v527 = vld [vmem:[%s343 + $0xd0] sm:$0xff]
        %v528 = vld [vmem:[%s343 + $0xd8] sm:$0xff]
        %v529 = vld [vmem:[%s343 + $0xe0] sm:$0xff]
        %v530 = vld [vmem:[%s343 + $0xe8] sm:$0xff]
        %v531 = vld [vmem:[%s343 + $0xf0] sm:$0xff]
        %v532 = vld [vmem:[%s343 + $0xf8] sm:$0xff]
        %533 = vmatprep.subr.mxu0 0.0
        %534 = vmatpush1.xpose.msra.mxu0 %v501
        %535 = vmatprep.subr.mxu0 0.0
        %536 = vmatpush1.xpose.msra.mxu0 %v502
        %537 = vmatprep.subr.mxu0 0.0
        %538 = vmatpush1.xpose.msra.mxu0 %v503
        %539 = vmatprep.subr.mxu0 0.0
        %540 = vmatpush1.xpose.msra.mxu0 %v504
        %541 = vmatprep.subr.mxu0 0.0
        %542 = vmatpush1.xpose.msra.mxu0 %v505
        %543 = vmatprep.subr.mxu0 0.0
        %544 = vmatpush1.xpose.msra.mxu0 %v506
        %545 = vmatprep.subr.mxu0 0.0
        %546 = vmatpush1.xpose.msra.mxu0 %v507
        %547 = vmatprep.subr.mxu0 0.0
        %548 = vmatpush1.xpose.msra.mxu0 %v508
        %549 = vmatprep.subr.mxu0 0.0
        %550 = vmatpush1.xpose.msra.mxu0 %v509
        %551 = vmatprep.subr.mxu0 0.0
        %552 = vmatpush1.xpose.msra.mxu0 %v510
        %553 = vmatprep.subr.mxu0 0.0
        %554 = vmatpush1.xpose.msra.mxu0 %v511
        %555 = vmatprep.subr.mxu0 0.0
        %556 = vmatpush1.xpose.msra.mxu0 %v512
        %557 = vmatprep.subr.mxu0 0.0
        %558 = vmatpush1.xpose.msra.mxu0 %v513
        %559 = vmatprep.subr.mxu0 0.0
        %560 = vmatpush1.xpose.msra.mxu0 %v514
        %561 = vmatprep.subr.mxu0 0.0
        %562 = vmatpush1.xpose.msra.mxu0 %v515
        %563 = vmatprep.subr.mxu0 0.0
        %564 = vmatpush1.xpose.msra.mxu0 %v516
        %565 = vmatprep.subr.mxu0 0.0
        %566 = vmatpush1.xpose.msra.mxu0 %v517
        %567 = vmatprep.subr.mxu0 0.0
        %568 = vmatpush1.xpose.msra.mxu0 %v518
        %569 = vmatprep.subr.mxu0 0.0
        %570 = vmatpush1.xpose.msra.mxu0 %v519
        %571 = vmatprep.subr.mxu0 0.0
        %572 = vmatpush1.xpose.msra.mxu0 %v520
        %573 = vmatprep.subr.mxu0 0.0
        %574 = vmatpush1.xpose.msra.mxu0 %v521
        %575 = vmatprep.subr.mxu0 0.0
        %576 = vmatpush1.xpose.msra.mxu0 %v522
        %577 = vmatprep.subr.mxu0 0.0
        %578 = vmatpush1.xpose.msra.mxu0 %v523
        %579 = vmatprep.subr.mxu0 0.0
        %580 = vmatpush1.xpose.msra.mxu0 %v524
        %581 = vmatprep.subr.mxu0 0.0
        %582 = vmatpush1.xpose.msra.mxu0 %v525
        %583 = vmatprep.subr.mxu0 0.0
        %584 = vmatpush1.xpose.msra.mxu0 %v526
        %585 = vmatprep.subr.mxu0 0.0
        %586 = vmatpush1.xpose.msra.mxu0 %v527
        %587 = vmatprep.subr.mxu0 0.0
        %588 = vmatpush1.xpose.msra.mxu0 %v528
        %589 = vmatprep.subr.mxu0 0.0
        %590 = vmatpush1.xpose.msra.mxu0 %v529
        %591 = vmatprep.subr.mxu0 0.0
        %592 = vmatpush1.xpose.msra.mxu0 %v530
        %593 = vmatprep.subr.mxu0 0.0
        %594 = vmatpush1.xpose.msra.mxu0 %v531
        %595 = vmatprep.subr.mxu0 0.0
        %596 = vmatpush1.xpose.msra.mxu0 %v532
        %597 = vmatprep.mubr.f32.mxu0 0.0
        %598 = vmatmul.mubr.f32.gmra.mrb[0].mxu0 %v485
        %v599 = vpop.f32.mrb[0].mxu0
        %v600 = vadd.f32 0.0, %v599
        %v601 = vpop.f32.mrb[0].mxu0
        %v602 = vadd.f32 0.0, %v601
        %603 = vmatprep.mubr.f32.mxu0 0.0
        %604 = vmatmul.mubr.f32.gmra.mrb[0].mxu0 %v486
        %v605 = vpop.f32.mrb[0].mxu0
        %v606 = vadd.f32 0.0, %v605
        %v607 = vpop.f32.mrb[0].mxu0
        %v608 = vadd.f32 0.0, %v607
        %609 = vmatprep.mubr.f32.mxu0 0.0
        %610 = vmatmul.mubr.f32.gmra.mrb[0].mxu0 %v487
        %v611 = vpop.f32.mrb[0].mxu0
        %v612 = vadd.f32 0.0, %v611
        %v613 = vpop.f32.mrb[0].mxu0
        %v614 = vadd.f32 0.0, %v613
        %615 = vmatprep.mubr.f32.mxu0 0.0
        %616 = vmatmul.mubr.f32.gmra.mrb[0].mxu0 %v488
        %v617 = vpop.f32.mrb[0].mxu0
        %v618 = vadd.f32 0.0, %v617
        %v619 = vpop.f32.mrb[0].mxu0
        %v620 = vadd.f32 0.0, %v619
        %621 = vmatprep.mubr.f32.mxu0 0.0
        %622 = vmatmul.mubr.f32.gmra.mrb[0].mxu0 %v489
        %v623 = vpop.f32.mrb[0].mxu0
        %v624 = vadd.f32 0.0, %v623
        %v625 = vpop.f32.mrb[0].mxu0
        %v626 = vadd.f32 0.0, %v625
        %627 = vmatprep.mubr.f32.mxu0 0.0
        %628 = vmatmul.mubr.f32.gmra.mrb[0].mxu0 %v490
        %v629 = vpop.f32.mrb[0].mxu0
        %v630 = vadd.f32 0.0, %v629
        %v631 = vpop.f32.mrb[0].mxu0
        %v632 = vadd.f32 0.0, %v631
        %633 = vmatprep.mubr.f32.mxu0 0.0
        %634 = vmatmul.mubr.f32.gmra.mrb[0].mxu0 %v491
        %v635 = vpop.f32.mrb[0].mxu0
        %v636 = vadd.f32 0.0, %v635
        %v637 = vpop.f32.mrb[0].mxu0
        %v638 = vadd.f32 0.0, %v637
        %639 = vmatprep.mubr.f32.mxu0 0.0
        %640 = vmatmul.mubr.f32.gmra.mrb[0].mxu0 %v492
        %v641 = vpop.f32.mrb[0].mxu0
        %v642 = vadd.f32 0.0, %v641
        %v643 = vpop.f32.mrb[0].mxu0
        %v644 = vadd.f32 0.0, %v643
        %645 = vmatprep.mubr.f32.mxu0 0.0
        %646 = vmatmul.mubr.f32.gmra.mrb[0].mxu0 %v493
        %v647 = vpop.f32.mrb[0].mxu0
        %v648 = vadd.f32 0.0, %v647
        %v649 = vpop.f32.mrb[0].mxu0
        %v650 = vadd.f32 0.0, %v649
        %651 = vmatprep.mubr.f32.mxu0 0.0
        %652 = vmatmul.mubr.f32.gmra.mrb[0].mxu0 %v494
        %v653 = vpop.f32.mrb[0].mxu0
        %v654 = vadd.f32 0.0, %v653
        %v655 = vpop.f32.mrb[0].mxu0
        %v656 = vadd.f32 0.0, %v655
        %657 = vmatprep.mubr.f32.mxu0 0.0
        %658 = vmatmul.mubr.f32.gmra.mrb[0].mxu0 %v495
        %v659 = vpop.f32.mrb[0].mxu0
        %v660 = vadd.f32 0.0, %v659
        %v661 = vpop.f32.mrb[0].mxu0
        %v662 = vadd.f32 0.0, %v661
        %663 = vmatprep.mubr.f32.mxu0 0.0
        %664 = vmatmul.mubr.f32.gmra.mrb[0].mxu0 %v496
        %v665 = vpop.f32.mrb[0].mxu0
        %v666 = vadd.f32 0.0, %v665
        %v667 = vpop.f32.mrb[0].mxu0
        %v668 = vadd.f32 0.0, %v667
        %669 = vmatprep.mubr.f32.mxu0 0.0
        %670 = vmatmul.mubr.f32.gmra.mrb[0].mxu0 %v497
        %v671 = vpop.f32.mrb[0].mxu0
        %v672 = vadd.f32 0.0, %v671
        %v673 = vpop.f32.mrb[0].mxu0
        %v674 = vadd.f32 0.0, %v673
        %675 = vmatprep.mubr.f32.mxu0 0.0
        %676 = vmatmul.mubr.f32.gmra.mrb[0].mxu0 %v498
        %v677 = vpop.f32.mrb[0].mxu0
        %v678 = vadd.f32 0.0, %v677
        %v679 = vpop.f32.mrb[0].mxu0
        %v680 = vadd.f32 0.0, %v679
        %681 = vmatprep.mubr.f32.mxu0 0.0
        %682 = vmatmul.mubr.f32.gmra.mrb[0].mxu0 %v499
        %v683 = vpop.f32.mrb[0].mxu0
        %v684 = vadd.f32 0.0, %v683
        %v685 = vpop.f32.mrb[0].mxu0
        %v686 = vadd.f32 0.0, %v685
        %687 = vmatprep.mubr.f32.mxu0 0.0
        %688 = vmatmul.mubr.f32.gmra.mrb[0].mxu0 %v500
        %v689 = vpop.f32.mrb[0].mxu0
        %v690 = vadd.f32 0.0, %v689
        %v691 = vpop.f32.mrb[0].mxu0
        %v692 = vadd.f32 0.0, %v691
        %693 = vdwg.mxu0
        %p694 = scmp.lt.s32.totalorder %s35, 2
        // Predicated region
        $region49: #{tpu_custom_call.1} parent=31 // pred_check
          %p695 = pneg %p694
        $region50: #{tpu_custom_call.1} parent=31 // pred_check_branch
          %697 = sbr.rel (%p695) target = $region52
        $region51: #{tpu_custom_call.1} parent=31 // pred_region
          %v698 = vld [vmem:[#allocation2] sm:$0xff]
          %v699 = vld [vmem:[#allocation2 + $0x8] sm:$0xff]
          %v700 = vld [vmem:[#allocation2 + $0x10] sm:$0xff]
          %v701 = vld [vmem:[#allocation2 + $0x18] sm:$0xff]
          %v702 = vld [vmem:[#allocation2 + $0x20] sm:$0xff]
          %v703 = vld [vmem:[#allocation2 + $0x28] sm:$0xff]
          %v704 = vld [vmem:[#allocation2 + $0x30] sm:$0xff]
          %v705 = vld [vmem:[#allocation2 + $0x38] sm:$0xff]
          %v706 = vld [vmem:[#allocation2 + $0x40] sm:$0xff]
          %v707 = vld [vmem:[#allocation2 + $0x48] sm:$0xff]
          %v708 = vld [vmem:[#allocation2 + $0x50] sm:$0xff]
          %v709 = vld [vmem:[#allocation2 + $0x58] sm:$0xff]
          %v710 = vld [vmem:[#allocation2 + $0x60] sm:$0xff]
          %v711 = vld [vmem:[#allocation2 + $0x68] sm:$0xff]
          %v712 = vld [vmem:[#allocation2 + $0x70] sm:$0xff]
          %v713 = vld [vmem:[#allocation2 + $0x78] sm:$0xff]
          %v714 = vmax.f32 %v600, %v602
          %715 = vmax.xlane.f32.xlu0 %v714
          %v716 = vpop.xlane.xlu0 %715
          %v717 = vmax.f32 %v606, %v608
          %718 = vmax.xlane.f32.xlu0 %v717
          %v719 = vpop.xlane.xlu0 %718
          %v720 = vmax.f32 %v612, %v614
          %721 = vmax.xlane.f32.xlu0 %v720
          %v722 = vpop.xlane.xlu0 %721
          %v723 = vmax.f32 %v618, %v620
          %724 = vmax.xlane.f32.xlu0 %v723
          %v725 = vpop.xlane.xlu0 %724
          %v726 = vmax.f32 %v624, %v626
          %727 = vmax.xlane.f32.xlu0 %v726
          %v728 = vpop.xlane.xlu0 %727
          %v729 = vmax.f32 %v630, %v632
          %730 = vmax.xlane.f32.xlu0 %v729
          %v731 = vpop.xlane.xlu0 %730
          %v732 = vmax.f32 %v636, %v638
          %733 = vmax.xlane.f32.xlu0 %v732
          %v734 = vpop.xlane.xlu0 %733
          %v735 = vmax.f32 %v642, %v644
          %736 = vmax.xlane.f32.xlu0 %v735
          %v737 = vpop.xlane.xlu0 %736
          %v738 = vmax.f32 %v648, %v650
          %739 = vmax.xlane.f32.xlu0 %v738
          %v740 = vpop.xlane.xlu0 %739
          %v741 = vmax.f32 %v654, %v656
          %742 = vmax.xlane.f32.xlu0 %v741
          %v743 = vpop.xlane.xlu0 %742
          %v744 = vmax.f32 %v660, %v662
          %745 = vmax.xlane.f32.xlu0 %v744
          %v746 = vpop.xlane.xlu0 %745
          %v747 = vmax.f32 %v666, %v668
          %748 = vmax.xlane.f32.xlu0 %v747
          %v749 = vpop.xlane.xlu0 %748
          %v750 = vmax.f32 %v672, %v674
          %751 = vmax.xlane.f32.xlu0 %v750
          %v752 = vpop.xlane.xlu0 %751
          %v753 = vmax.f32 %v678, %v680
          %754 = vmax.xlane.f32.xlu0 %v753
          %v755 = vpop.xlane.xlu0 %754
          %v756 = vmax.f32 %v684, %v686
          %757 = vmax.xlane.f32.xlu0 %v756
          %v758 = vpop.xlane.xlu0 %757
          %v759 = vmax.f32 %v690, %v692
          %760 = vmax.xlane.f32.xlu0 %v759
          %v761 = vpop.xlane.xlu0 %760
          %v762 = vmax.f32 %v698, %v716
          %v763 = vmax.f32 %v699, %v719
          %v764 = vmax.f32 %v700, %v722
          %v765 = vmax.f32 %v701, %v725
          %v766 = vmax.f32 %v702, %v728
          %v767 = vmax.f32 %v703, %v731
          %v768 = vmax.f32 %v704, %v734
          %v769 = vmax.f32 %v705, %v737
          %v770 = vmax.f32 %v706, %v740
          %v771 = vmax.f32 %v707, %v743
          %v772 = vmax.f32 %v708, %v746
          %v773 = vmax.f32 %v709, %v749
          %v774 = vmax.f32 %v710, %v752
          %v775 = vmax.f32 %v711, %v755
          %v776 = vmax.f32 %v712, %v758
          %v777 = vmax.f32 %v713, %v761
          %v778 = vld [vmem:[#allocation3] sm:$0xff]
          %v779 = vld [vmem:[#allocation3 + $0x8] sm:$0xff]
          %v780 = vld [vmem:[#allocation3 + $0x10] sm:$0xff]
          %v781 = vld [vmem:[#allocation3 + $0x18] sm:$0xff]
          %v782 = vld [vmem:[#allocation3 + $0x20] sm:$0xff]
          %v783 = vld [vmem:[#allocation3 + $0x28] sm:$0xff]
          %v784 = vld [vmem:[#allocation3 + $0x30] sm:$0xff]
          %v785 = vld [vmem:[#allocation3 + $0x38] sm:$0xff]
          %v786 = vld [vmem:[#allocation3 + $0x40] sm:$0xff]
          %v787 = vld [vmem:[#allocation3 + $0x48] sm:$0xff]
          %v788 = vld [vmem:[#allocation3 + $0x50] sm:$0xff]
          %v789 = vld [vmem:[#allocation3 + $0x58] sm:$0xff]
          %v790 = vld [vmem:[#allocation3 + $0x60] sm:$0xff]
          %v791 = vld [vmem:[#allocation3 + $0x68] sm:$0xff]
          %v792 = vld [vmem:[#allocation3 + $0x70] sm:$0xff]
          %v793 = vld [vmem:[#allocation3 + $0x78] sm:$0xff]
          %v794 = vsub.f32 %v698, %v762
          %v795 = vsub.f32 %v699, %v763
          %v796 = vsub.f32 %v700, %v764
          %v797 = vsub.f32 %v701, %v765
          %v798 = vsub.f32 %v702, %v766
          %v799 = vsub.f32 %v703, %v767
          %v800 = vsub.f32 %v704, %v768
          %v801 = vsub.f32 %v705, %v769
          %v802 = vsub.f32 %v706, %v770
          %v803 = vsub.f32 %v707, %v771
          %v804 = vsub.f32 %v708, %v772
          %v805 = vsub.f32 %v709, %v773
          %v806 = vsub.f32 %v710, %v774
          %v807 = vsub.f32 %v711, %v775
          %v808 = vsub.f32 %v712, %v776
          %v809 = vsub.f32 %v713, %v777
          %v810 = vmul.f32 %v794, 1.442695
          %v811 = vpow.pop %v810
          %v812 = vmul.f32 %v795, 1.442695
          %v813 = vpow.pop %v812
          %v814 = vmul.f32 %v796, 1.442695
          %v815 = vpow.pop %v814
          %v816 = vmul.f32 %v797, 1.442695
          %v817 = vpow.pop %v816
          %v818 = vmul.f32 %v798, 1.442695
          %v819 = vpow.pop %v818
          %v820 = vmul.f32 %v799, 1.442695
          %v821 = vpow.pop %v820
          %v822 = vmul.f32 %v800, 1.442695
          %v823 = vpow.pop %v822
          %v824 = vmul.f32 %v801, 1.442695
          %v825 = vpow.pop %v824
          %v826 = vmul.f32 %v802, 1.442695
          %v827 = vpow.pop %v826
          %v828 = vmul.f32 %v803, 1.442695
          %v829 = vpow.pop %v828
          %v830 = vmul.f32 %v804, 1.442695
          %v831 = vpow.pop %v830
          %v832 = vmul.f32 %v805, 1.442695
          %v833 = vpow.pop %v832
          %v834 = vmul.f32 %v806, 1.442695
          %v835 = vpow.pop %v834
          %v836 = vmul.f32 %v807, 1.442695
          %v837 = vpow.pop %v836
          %v838 = vmul.f32 %v808, 1.442695
          %v839 = vpow.pop %v838
          %v840 = vmul.f32 %v809, 1.442695
          %v841 = vpow.pop %v840
          %v842 = vmul.f32 %v778, %v811
          %v843 = vmul.f32 %v779, %v813
          %v844 = vmul.f32 %v780, %v815
          %v845 = vmul.f32 %v781, %v817
          %v846 = vmul.f32 %v782, %v819
          %v847 = vmul.f32 %v783, %v821
          %v848 = vmul.f32 %v784, %v823
          %v849 = vmul.f32 %v785, %v825
          %v850 = vmul.f32 %v786, %v827
          %v851 = vmul.f32 %v787, %v829
          %v852 = vmul.f32 %v788, %v831
          %v853 = vmul.f32 %v789, %v833
          %v854 = vmul.f32 %v790, %v835
          %v855 = vmul.f32 %v791, %v837
          %v856 = vmul.f32 %v792, %v839
          %v857 = vmul.f32 %v793, %v841
          %859 = vset.pattern.permute.xlu0 0
          %860 = vperm.xlu0 %859, %v762
          %v861 = vpop.permute.xlu0 %860
          %864 = vset.pattern.permute.xlu0 0
          %865 = vperm.xlu0 %864, %v763
          %v866 = vpop.permute.xlu0 %865
          %869 = vset.pattern.permute.xlu0 0
          %870 = vperm.xlu0 %869, %v764
          %v871 = vpop.permute.xlu0 %870
          %874 = vset.pattern.permute.xlu0 0
          %875 = vperm.xlu0 %874, %v765
          %v876 = vpop.permute.xlu0 %875
          %879 = vset.pattern.permute.xlu0 0
          %880 = vperm.xlu0 %879, %v766
          %v881 = vpop.permute.xlu0 %880
          %884 = vset.pattern.permute.xlu0 0
          %885 = vperm.xlu0 %884, %v767
          %v886 = vpop.permute.xlu0 %885
          %889 = vset.pattern.permute.xlu0 0
          %890 = vperm.xlu0 %889, %v768
          %v891 = vpop.permute.xlu0 %890
          %894 = vset.pattern.permute.xlu0 0
          %895 = vperm.xlu0 %894, %v769
          %v896 = vpop.permute.xlu0 %895
          %899 = vset.pattern.permute.xlu0 0
          %900 = vperm.xlu0 %899, %v770
          %v901 = vpop.permute.xlu0 %900
          %904 = vset.pattern.permute.xlu0 0
          %905 = vperm.xlu0 %904, %v771
          %v906 = vpop.permute.xlu0 %905
          %909 = vset.pattern.permute.xlu0 0
          %910 = vperm.xlu0 %909, %v772
          %v911 = vpop.permute.xlu0 %910
          %914 = vset.pattern.permute.xlu0 0
          %915 = vperm.xlu0 %914, %v773
          %v916 = vpop.permute.xlu0 %915
          %919 = vset.pattern.permute.xlu0 0
          %920 = vperm.xlu0 %919, %v774
          %v921 = vpop.permute.xlu0 %920
          %924 = vset.pattern.permute.xlu0 0
          %925 = vperm.xlu0 %924, %v775
          %v926 = vpop.permute.xlu0 %925
          %929 = vset.pattern.permute.xlu0 0
          %930 = vperm.xlu0 %929, %v776
          %v931 = vpop.permute.xlu0 %930
          %934 = vset.pattern.permute.xlu0 0
          %935 = vperm.xlu0 %934, %v777
          %v936 = vpop.permute.xlu0 %935
          %v938 = vsub.f32 %v600, %v861
          %v939 = vsub.f32 %v602, %v861
          %v940 = vsub.f32 %v606, %v866
          %v941 = vsub.f32 %v608, %v866
          %v942 = vsub.f32 %v612, %v871
          %v943 = vsub.f32 %v614, %v871
          %v944 = vsub.f32 %v618, %v876
          %v945 = vsub.f32 %v620, %v876
          %v946 = vsub.f32 %v624, %v881
          %v947 = vsub.f32 %v626, %v881
          %v948 = vsub.f32 %v630, %v886
          %v949 = vsub.f32 %v632, %v886
          %v950 = vsub.f32 %v636, %v891
          %v951 = vsub.f32 %v638, %v891
          %v952 = vsub.f32 %v642, %v896
          %v953 = vsub.f32 %v644, %v896
          %v954 = vsub.f32 %v648, %v901
          %v955 = vsub.f32 %v650, %v901
          %v956 = vsub.f32 %v654, %v906
          %v957 = vsub.f32 %v656, %v906
          %v958 = vsub.f32 %v660, %v911
          %v959 = vsub.f32 %v662, %v911
          %v960 = vsub.f32 %v666, %v916
          %v961 = vsub.f32 %v668, %v916
          %v962 = vsub.f32 %v672, %v921
          %v963 = vsub.f32 %v674, %v921
          %v964 = vsub.f32 %v678, %v926
          %v965 = vsub.f32 %v680, %v926
          %v966 = vsub.f32 %v684, %v931
          %v967 = vsub.f32 %v686, %v931
          %v968 = vsub.f32 %v690, %v936
          %v969 = vsub.f32 %v692, %v936
          %v970 = vmul.f32 %v938, 1.442695
          %v971 = vpow.pop %v970
          %v972 = vmul.f32 %v939, 1.442695
          %v973 = vpow.pop %v972
          %v974 = vmul.f32 %v940, 1.442695
          %v975 = vpow.pop %v974
          %v976 = vmul.f32 %v941, 1.442695
          %v977 = vpow.pop %v976
          %v978 = vmul.f32 %v942, 1.442695
          %v979 = vpow.pop %v978
          %v980 = vmul.f32 %v943, 1.442695
          %v981 = vpow.pop %v980
          %v982 = vmul.f32 %v944, 1.442695
          %v983 = vpow.pop %v982
          %v984 = vmul.f32 %v945, 1.442695
          %v985 = vpow.pop %v984
          %v986 = vmul.f32 %v946, 1.442695
          %v987 = vpow.pop %v986
          %v988 = vmul.f32 %v947, 1.442695
          %v989 = vpow.pop %v988
          %v990 = vmul.f32 %v948, 1.442695
          %v991 = vpow.pop %v990
          %v992 = vmul.f32 %v949, 1.442695
          %v993 = vpow.pop %v992
          %v994 = vmul.f32 %v950, 1.442695
          %v995 = vpow.pop %v994
          %v996 = vmul.f32 %v951, 1.442695
          %v997 = vpow.pop %v996
          %v998 = vmul.f32 %v952, 1.442695
          %v999 = vpow.pop %v998
          %v1000 = vmul.f32 %v953, 1.442695
          %v1001 = vpow.pop %v1000
          %v1002 = vmul.f32 %v954, 1.442695
          %v1003 = vpow.pop %v1002
          %v1004 = vmul.f32 %v955, 1.442695
          %v1005 = vpow.pop %v1004
          %v1006 = vmul.f32 %v956, 1.442695
          %v1007 = vpow.pop %v1006
          %v1008 = vmul.f32 %v957, 1.442695
          %v1009 = vpow.pop %v1008
          %v1010 = vmul.f32 %v958, 1.442695
          %v1011 = vpow.pop %v1010
          %v1012 = vmul.f32 %v959, 1.442695
          %v1013 = vpow.pop %v1012
          %v1014 = vmul.f32 %v960, 1.442695
          %v1015 = vpow.pop %v1014
          %v1016 = vmul.f32 %v961, 1.442695
          %v1017 = vpow.pop %v1016
          %v1018 = vmul.f32 %v962, 1.442695
          %v1019 = vpow.pop %v1018
          %v1020 = vmul.f32 %v963, 1.442695
          %v1021 = vpow.pop %v1020
          %v1022 = vmul.f32 %v964, 1.442695
          %v1023 = vpow.pop %v1022
          %v1024 = vmul.f32 %v965, 1.442695
          %v1025 = vpow.pop %v1024
          %v1026 = vmul.f32 %v966, 1.442695
          %v1027 = vpow.pop %v1026
          %v1028 = vmul.f32 %v967, 1.442695
          %v1029 = vpow.pop %v1028
          %v1030 = vmul.f32 %v968, 1.442695
          %v1031 = vpow.pop %v1030
          %v1032 = vmul.f32 %v969, 1.442695
          %v1033 = vpow.pop %v1032
          %v1034 = vadd.f32 %v971, %v973
          %1035 = vadd.xlane.f32.xlu0 %v1034
          %v1036 = vpop.xlane.xlu0 %1035
          %v1037 = vadd.f32 %v975, %v977
          %1038 = vadd.xlane.f32.xlu0 %v1037
          %v1039 = vpop.xlane.xlu0 %1038
          %v1040 = vadd.f32 %v979, %v981
          %1041 = vadd.xlane.f32.xlu0 %v1040
          %v1042 = vpop.xlane.xlu0 %1041
          %v1043 = vadd.f32 %v983, %v985
          %1044 = vadd.xlane.f32.xlu0 %v1043
          %v1045 = vpop.xlane.xlu0 %1044
          %v1046 = vadd.f32 %v987, %v989
          %1047 = vadd.xlane.f32.xlu0 %v1046
          %v1048 = vpop.xlane.xlu0 %1047
          %v1049 = vadd.f32 %v991, %v993
          %1050 = vadd.xlane.f32.xlu0 %v1049
          %v1051 = vpop.xlane.xlu0 %1050
          %v1052 = vadd.f32 %v995, %v997
          %1053 = vadd.xlane.f32.xlu0 %v1052
          %v1054 = vpop.xlane.xlu0 %1053
          %v1055 = vadd.f32 %v999, %v1001
          %1056 = vadd.xlane.f32.xlu0 %v1055
          %v1057 = vpop.xlane.xlu0 %1056
          %v1058 = vadd.f32 %v1003, %v1005
          %1059 = vadd.xlane.f32.xlu0 %v1058
          %v1060 = vpop.xlane.xlu0 %1059
          %v1061 = vadd.f32 %v1007, %v1009
          %1062 = vadd.xlane.f32.xlu0 %v1061
          %v1063 = vpop.xlane.xlu0 %1062
          %v1064 = vadd.f32 %v1011, %v1013
          %1065 = vadd.xlane.f32.xlu0 %v1064
          %v1066 = vpop.xlane.xlu0 %1065
          %v1067 = vadd.f32 %v1015, %v1017
          %1068 = vadd.xlane.f32.xlu0 %v1067
          %v1069 = vpop.xlane.xlu0 %1068
          %v1070 = vadd.f32 %v1019, %v1021
          %1071 = vadd.xlane.f32.xlu0 %v1070
          %v1072 = vpop.xlane.xlu0 %1071
          %v1073 = vadd.f32 %v1023, %v1025
          %1074 = vadd.xlane.f32.xlu0 %v1073
          %v1075 = vpop.xlane.xlu0 %1074
          %v1076 = vadd.f32 %v1027, %v1029
          %1077 = vadd.xlane.f32.xlu0 %v1076
          %v1078 = vpop.xlane.xlu0 %1077
          %v1079 = vadd.f32 %v1031, %v1033
          %1080 = vadd.xlane.f32.xlu0 %v1079
          %v1081 = vpop.xlane.xlu0 %1080
          %v1082 = vadd.f32 %v842, %v1036
          %v1083 = vadd.f32 %v843, %v1039
          %v1084 = vadd.f32 %v844, %v1042
          %v1085 = vadd.f32 %v845, %v1045
          %v1086 = vadd.f32 %v846, %v1048
          %v1087 = vadd.f32 %v847, %v1051
          %v1088 = vadd.f32 %v848, %v1054
          %v1089 = vadd.f32 %v849, %v1057
          %v1090 = vadd.f32 %v850, %v1060
          %v1091 = vadd.f32 %v851, %v1063
          %v1092 = vadd.f32 %v852, %v1066
          %v1093 = vadd.f32 %v853, %v1069
          %v1094 = vadd.f32 %v854, %v1072
          %v1095 = vadd.f32 %v855, %v1075
          %v1096 = vadd.f32 %v856, %v1078
          %v1097 = vadd.f32 %v857, %v1081
          %vm1098 = vcmask 7168
          %1099 = vst.msk [vmem:[#allocation3] sm:$0xff] %vm1098, %v1082
          %1100 = vst.msk [vmem:[#allocation3 + $0x8] sm:$0xff] %vm1098, %v1083
          %1101 = vst.msk [vmem:[#allocation3 + $0x10] sm:$0xff] %vm1098, %v1084
          %1102 = vst.msk [vmem:[#allocation3 + $0x18] sm:$0xff] %vm1098, %v1085
          %1103 = vst.msk [vmem:[#allocation3 + $0x20] sm:$0xff] %vm1098, %v1086
          %1104 = vst.msk [vmem:[#allocation3 + $0x28] sm:$0xff] %vm1098, %v1087
          %1105 = vst.msk [vmem:[#allocation3 + $0x30] sm:$0xff] %vm1098, %v1088
          %1106 = vst.msk [vmem:[#allocation3 + $0x38] sm:$0xff] %vm1098, %v1089
          %1107 = vst.msk [vmem:[#allocation3 + $0x40] sm:$0xff] %vm1098, %v1090
          %1108 = vst.msk [vmem:[#allocation3 + $0x48] sm:$0xff] %vm1098, %v1091
          %1109 = vst.msk [vmem:[#allocation3 + $0x50] sm:$0xff] %vm1098, %v1092
          %1110 = vst.msk [vmem:[#allocation3 + $0x58] sm:$0xff] %vm1098, %v1093
          %1111 = vst.msk [vmem:[#allocation3 + $0x60] sm:$0xff] %vm1098, %v1094
          %1112 = vst.msk [vmem:[#allocation3 + $0x68] sm:$0xff] %vm1098, %v1095
          %1113 = vst.msk [vmem:[#allocation3 + $0x70] sm:$0xff] %vm1098, %v1096
          %1114 = vst.msk [vmem:[#allocation3 + $0x78] sm:$0xff] %vm1098, %v1097
          %1115 = vst.msk [vmem:[#allocation2] sm:$0xff] %vm1098, %v762
          %1116 = vst.msk [vmem:[#allocation2 + $0x8] sm:$0xff] %vm1098, %v763
          %1117 = vst.msk [vmem:[#allocation2 + $0x10] sm:$0xff] %vm1098, %v764
          %1118 = vst.msk [vmem:[#allocation2 + $0x18] sm:$0xff] %vm1098, %v765
          %1119 = vst.msk [vmem:[#allocation2 + $0x20] sm:$0xff] %vm1098, %v766
          %1120 = vst.msk [vmem:[#allocation2 + $0x28] sm:$0xff] %vm1098, %v767
          %1121 = vst.msk [vmem:[#allocation2 + $0x30] sm:$0xff] %vm1098, %v768
          %1122 = vst.msk [vmem:[#allocation2 + $0x38] sm:$0xff] %vm1098, %v769
          %1123 = vst.msk [vmem:[#allocation2 + $0x40] sm:$0xff] %vm1098, %v770
          %1124 = vst.msk [vmem:[#allocation2 + $0x48] sm:$0xff] %vm1098, %v771
          %1125 = vst.msk [vmem:[#allocation2 + $0x50] sm:$0xff] %vm1098, %v772
          %1126 = vst.msk [vmem:[#allocation2 + $0x58] sm:$0xff] %vm1098, %v773
          %1127 = vst.msk [vmem:[#allocation2 + $0x60] sm:$0xff] %vm1098, %v774
          %1128 = vst.msk [vmem:[#allocation2 + $0x68] sm:$0xff] %vm1098, %v775
          %1129 = vst.msk [vmem:[#allocation2 + $0x70] sm:$0xff] %vm1098, %v776
          %1130 = vst.msk [vmem:[#allocation2 + $0x78] sm:$0xff] %vm1098, %v777
        $region52: #{tpu_custom_call.1} parent=31 // pred_fallthru
          _
        %p1131 = scmp.ge.s32.totalorder %s35, 2
        // Predicated region
        $region53: #{tpu_custom_call.1} parent=31 // pred_check
          %p1132 = pneg %p1131
        $region54: #{tpu_custom_call.1} parent=31 // pred_check_branch
          %1134 = sbr.rel (%p1132) target = $region56
        $region55: #{tpu_custom_call.1} parent=31 // pred_region
          %v1135 = vld [vmem:[#allocation3] sm:$0xff]
          %v1136 = vld [vmem:[#allocation3 + $0x8] sm:$0xff]
          %v1137 = vld [vmem:[#allocation3 + $0x10] sm:$0xff]
          %v1138 = vld [vmem:[#allocation3 + $0x18] sm:$0xff]
          %v1139 = vld [vmem:[#allocation3 + $0x20] sm:$0xff]
          %v1140 = vld [vmem:[#allocation3 + $0x28] sm:$0xff]
          %v1141 = vld [vmem:[#allocation3 + $0x30] sm:$0xff]
          %v1142 = vld [vmem:[#allocation3 + $0x38] sm:$0xff]
          %v1143 = vld [vmem:[#allocation3 + $0x40] sm:$0xff]
          %v1144 = vld [vmem:[#allocation3 + $0x48] sm:$0xff]
          %v1145 = vld [vmem:[#allocation3 + $0x50] sm:$0xff]
          %v1146 = vld [vmem:[#allocation3 + $0x58] sm:$0xff]
          %v1147 = vld [vmem:[#allocation3 + $0x60] sm:$0xff]
          %v1148 = vld [vmem:[#allocation3 + $0x68] sm:$0xff]
          %v1149 = vld [vmem:[#allocation3 + $0x70] sm:$0xff]
          %v1150 = vld [vmem:[#allocation3 + $0x78] sm:$0xff]
          %v1151 = vrcp.pop %v1135
          %v1152 = vrcp.pop %v1136
          %v1153 = vrcp.pop %v1137
          %v1154 = vrcp.pop %v1138
          %v1155 = vrcp.pop %v1139
          %v1156 = vrcp.pop %v1140
          %v1157 = vrcp.pop %v1141
          %v1158 = vrcp.pop %v1142
          %v1159 = vrcp.pop %v1143
          %v1160 = vrcp.pop %v1144
          %v1161 = vrcp.pop %v1145
          %v1162 = vrcp.pop %v1146
          %v1163 = vrcp.pop %v1147
          %v1164 = vrcp.pop %v1148
          %v1165 = vrcp.pop %v1149
          %v1166 = vrcp.pop %v1150
          %v1167 = vmul.f32 %v1135, %v1151
          %v1168 = vmul.f32 %v1136, %v1152
          %v1169 = vmul.f32 %v1137, %v1153
          %v1170 = vmul.f32 %v1138, %v1154
          %v1171 = vmul.f32 %v1139, %v1155
          %v1172 = vmul.f32 %v1140, %v1156
          %v1173 = vmul.f32 %v1141, %v1157
          %v1174 = vmul.f32 %v1142, %v1158
          %v1175 = vmul.f32 %v1143, %v1159
          %v1176 = vmul.f32 %v1144, %v1160
          %v1177 = vmul.f32 %v1145, %v1161
          %v1178 = vmul.f32 %v1146, %v1162
          %v1179 = vmul.f32 %v1147, %v1163
          %v1180 = vmul.f32 %v1148, %v1164
          %v1181 = vmul.f32 %v1149, %v1165
          %v1182 = vmul.f32 %v1150, %v1166
          %v1183 = vsub.f32 2.0, %v1167
          %v1184 = vsub.f32 2.0, %v1168
          %v1185 = vsub.f32 2.0, %v1169
          %v1186 = vsub.f32 2.0, %v1170
          %v1187 = vsub.f32 2.0, %v1171
          %v1188 = vsub.f32 2.0, %v1172
          %v1189 = vsub.f32 2.0, %v1173
          %v1190 = vsub.f32 2.0, %v1174
          %v1191 = vsub.f32 2.0, %v1175
          %v1192 = vsub.f32 2.0, %v1176
          %v1193 = vsub.f32 2.0, %v1177
          %v1194 = vsub.f32 2.0, %v1178
          %v1195 = vsub.f32 2.0, %v1179
          %v1196 = vsub.f32 2.0, %v1180
          %v1197 = vsub.f32 2.0, %v1181
          %v1198 = vsub.f32 2.0, %v1182
          %v1199 = vmul.f32 %v1151, %v1183
          %v1200 = vmul.f32 %v1152, %v1184
          %v1201 = vmul.f32 %v1153, %v1185
          %v1202 = vmul.f32 %v1154, %v1186
          %v1203 = vmul.f32 %v1155, %v1187
          %v1204 = vmul.f32 %v1156, %v1188
          %v1205 = vmul.f32 %v1157, %v1189
          %v1206 = vmul.f32 %v1158, %v1190
          %v1207 = vmul.f32 %v1159, %v1191
          %v1208 = vmul.f32 %v1160, %v1192
          %v1209 = vmul.f32 %v1161, %v1193
          %v1210 = vmul.f32 %v1162, %v1194
          %v1211 = vmul.f32 %v1163, %v1195
          %v1212 = vmul.f32 %v1164, %v1196
          %v1213 = vmul.f32 %v1165, %v1197
          %v1214 = vmul.f32 %v1166, %v1198
          %v1215 = vld [vmem:[#allocation2] sm:$0xff]
          %v1216 = vld [vmem:[#allocation2 + $0x8] sm:$0xff]
          %v1217 = vld [vmem:[#allocation2 + $0x10] sm:$0xff]
          %v1218 = vld [vmem:[#allocation2 + $0x18] sm:$0xff]
          %v1219 = vld [vmem:[#allocation2 + $0x20] sm:$0xff]
          %v1220 = vld [vmem:[#allocation2 + $0x28] sm:$0xff]
          %v1221 = vld [vmem:[#allocation2 + $0x30] sm:$0xff]
          %v1222 = vld [vmem:[#allocation2 + $0x38] sm:$0xff]
          %v1223 = vld [vmem:[#allocation2 + $0x40] sm:$0xff]
          %v1224 = vld [vmem:[#allocation2 + $0x48] sm:$0xff]
          %v1225 = vld [vmem:[#allocation2 + $0x50] sm:$0xff]
          %v1226 = vld [vmem:[#allocation2 + $0x58] sm:$0xff]
          %v1227 = vld [vmem:[#allocation2 + $0x60] sm:$0xff]
          %v1228 = vld [vmem:[#allocation2 + $0x68] sm:$0xff]
          %v1229 = vld [vmem:[#allocation2 + $0x70] sm:$0xff]
          %v1230 = vld [vmem:[#allocation2 + $0x78] sm:$0xff]
          %1232 = vset.pattern.permute.xlu0 0
          %1233 = vperm.xlu0 %1232, %v1215
          %v1234 = vpop.permute.xlu0 %1233
          %1237 = vset.pattern.permute.xlu0 0
          %1238 = vperm.xlu0 %1237, %v1216
          %v1239 = vpop.permute.xlu0 %1238
          %1242 = vset.pattern.permute.xlu0 0
          %1243 = vperm.xlu0 %1242, %v1217
          %v1244 = vpop.permute.xlu0 %1243
          %1247 = vset.pattern.permute.xlu0 0
          %1248 = vperm.xlu0 %1247, %v1218
          %v1249 = vpop.permute.xlu0 %1248
          %1252 = vset.pattern.permute.xlu0 0
          %1253 = vperm.xlu0 %1252, %v1219
          %v1254 = vpop.permute.xlu0 %1253
          %1257 = vset.pattern.permute.xlu0 0
          %1258 = vperm.xlu0 %1257, %v1220
          %v1259 = vpop.permute.xlu0 %1258
          %1262 = vset.pattern.permute.xlu0 0
          %1263 = vperm.xlu0 %1262, %v1221
          %v1264 = vpop.permute.xlu0 %1263
          %1267 = vset.pattern.permute.xlu0 0
          %1268 = vperm.xlu0 %1267, %v1222
          %v1269 = vpop.permute.xlu0 %1268
          %1272 = vset.pattern.permute.xlu0 0
          %1273 = vperm.xlu0 %1272, %v1223
          %v1274 = vpop.permute.xlu0 %1273
          %1277 = vset.pattern.permute.xlu0 0
          %1278 = vperm.xlu0 %1277, %v1224
          %v1279 = vpop.permute.xlu0 %1278
          %1282 = vset.pattern.permute.xlu0 0
          %1283 = vperm.xlu0 %1282, %v1225
          %v1284 = vpop.permute.xlu0 %1283
          %1287 = vset.pattern.permute.xlu0 0
          %1288 = vperm.xlu0 %1287, %v1226
          %v1289 = vpop.permute.xlu0 %1288
          %1292 = vset.pattern.permute.xlu0 0
          %1293 = vperm.xlu0 %1292, %v1227
          %v1294 = vpop.permute.xlu0 %1293
          %1297 = vset.pattern.permute.xlu0 0
          %1298 = vperm.xlu0 %1297, %v1228
          %v1299 = vpop.permute.xlu0 %1298
          %1302 = vset.pattern.permute.xlu0 0
          %1303 = vperm.xlu0 %1302, %v1229
          %v1304 = vpop.permute.xlu0 %1303
          %1307 = vset.pattern.permute.xlu0 0
          %1308 = vperm.xlu0 %1307, %v1230
          %v1309 = vpop.permute.xlu0 %1308
          %v1311 = vsub.f32 %v600, %v1234
          %v1312 = vsub.f32 %v602, %v1234
          %v1313 = vsub.f32 %v606, %v1239
          %v1314 = vsub.f32 %v608, %v1239
          %v1315 = vsub.f32 %v612, %v1244
          %v1316 = vsub.f32 %v614, %v1244
          %v1317 = vsub.f32 %v618, %v1249
          %v1318 = vsub.f32 %v620, %v1249
          %v1319 = vsub.f32 %v624, %v1254
          %v1320 = vsub.f32 %v626, %v1254
          %v1321 = vsub.f32 %v630, %v1259
          %v1322 = vsub.f32 %v632, %v1259
          %v1323 = vsub.f32 %v636, %v1264
          %v1324 = vsub.f32 %v638, %v1264
          %v1325 = vsub.f32 %v642, %v1269
          %v1326 = vsub.f32 %v644, %v1269
          %v1327 = vsub.f32 %v648, %v1274
          %v1328 = vsub.f32 %v650, %v1274
          %v1329 = vsub.f32 %v654, %v1279
          %v1330 = vsub.f32 %v656, %v1279
          %v1331 = vsub.f32 %v660, %v1284
          %v1332 = vsub.f32 %v662, %v1284
          %v1333 = vsub.f32 %v666, %v1289
          %v1334 = vsub.f32 %v668, %v1289
          %v1335 = vsub.f32 %v672, %v1294
          %v1336 = vsub.f32 %v674, %v1294
          %v1337 = vsub.f32 %v678, %v1299
          %v1338 = vsub.f32 %v680, %v1299
          %v1339 = vsub.f32 %v684, %v1304
          %v1340 = vsub.f32 %v686, %v1304
          %v1341 = vsub.f32 %v690, %v1309
          %v1342 = vsub.f32 %v692, %v1309
          %v1343 = vmul.f32 %v1311, 1.442695
          %v1344 = vpow.pop %v1343
          %v1345 = vmul.f32 %v1312, 1.442695
          %v1346 = vpow.pop %v1345
          %v1347 = vmul.f32 %v1313, 1.442695
          %v1348 = vpow.pop %v1347
          %v1349 = vmul.f32 %v1314, 1.442695
          %v1350 = vpow.pop %v1349
          %v1351 = vmul.f32 %v1315, 1.442695
          %v1352 = vpow.pop %v1351
          %v1353 = vmul.f32 %v1316, 1.442695
          %v1354 = vpow.pop %v1353
          %v1355 = vmul.f32 %v1317, 1.442695
          %v1356 = vpow.pop %v1355
          %v1357 = vmul.f32 %v1318, 1.442695
          %v1358 = vpow.pop %v1357
          %v1359 = vmul.f32 %v1319, 1.442695
          %v1360 = vpow.pop %v1359
          %v1361 = vmul.f32 %v1320, 1.442695
          %v1362 = vpow.pop %v1361
          %v1363 = vmul.f32 %v1321, 1.442695
          %v1364 = vpow.pop %v1363
          %v1365 = vmul.f32 %v1322, 1.442695
          %v1366 = vpow.pop %v1365
          %v1367 = vmul.f32 %v1323, 1.442695
          %v1368 = vpow.pop %v1367
          %v1369 = vmul.f32 %v1324, 1.442695
          %v1370 = vpow.pop %v1369
          %v1371 = vmul.f32 %v1325, 1.442695
          %v1372 = vpow.pop %v1371
          %v1373 = vmul.f32 %v1326, 1.442695
          %v1374 = vpow.pop %v1373
          %v1375 = vmul.f32 %v1327, 1.442695
          %v1376 = vpow.pop %v1375
          %v1377 = vmul.f32 %v1328, 1.442695
          %v1378 = vpow.pop %v1377
          %v1379 = vmul.f32 %v1329, 1.442695
          %v1380 = vpow.pop %v1379
          %v1381 = vmul.f32 %v1330, 1.442695
          %v1382 = vpow.pop %v1381
          %v1383 = vmul.f32 %v1331, 1.442695
          %v1384 = vpow.pop %v1383
          %v1385 = vmul.f32 %v1332, 1.442695
          %v1386 = vpow.pop %v1385
          %v1387 = vmul.f32 %v1333, 1.442695
          %v1388 = vpow.pop %v1387
          %v1389 = vmul.f32 %v1334, 1.442695
          %v1390 = vpow.pop %v1389
          %v1391 = vmul.f32 %v1335, 1.442695
          %v1392 = vpow.pop %v1391
          %v1393 = vmul.f32 %v1336, 1.442695
          %v1394 = vpow.pop %v1393
          %v1395 = vmul.f32 %v1337, 1.442695
          %v1396 = vpow.pop %v1395
          %v1397 = vmul.f32 %v1338, 1.442695
          %v1398 = vpow.pop %v1397
          %v1399 = vmul.f32 %v1339, 1.442695
          %v1400 = vpow.pop %v1399
          %v1401 = vmul.f32 %v1340, 1.442695
          %v1402 = vpow.pop %v1401
          %v1403 = vmul.f32 %v1341, 1.442695
          %v1404 = vpow.pop %v1403
          %v1405 = vmul.f32 %v1342, 1.442695
          %v1406 = vpow.pop %v1405
          %1408 = vset.pattern.permute.xlu0 0
          %1409 = vperm.xlu0 %1408, %v1199
          %v1410 = vpop.permute.xlu0 %1409
          %1413 = vset.pattern.permute.xlu0 0
          %1414 = vperm.xlu0 %1413, %v1200
          %v1415 = vpop.permute.xlu0 %1414
          %1418 = vset.pattern.permute.xlu0 0
          %1419 = vperm.xlu0 %1418, %v1201
          %v1420 = vpop.permute.xlu0 %1419
          %1423 = vset.pattern.permute.xlu0 0
          %1424 = vperm.xlu0 %1423, %v1202
          %v1425 = vpop.permute.xlu0 %1424
          %1428 = vset.pattern.permute.xlu0 0
          %1429 = vperm.xlu0 %1428, %v1203
          %v1430 = vpop.permute.xlu0 %1429
          %1433 = vset.pattern.permute.xlu0 0
          %1434 = vperm.xlu0 %1433, %v1204
          %v1435 = vpop.permute.xlu0 %1434
          %1438 = vset.pattern.permute.xlu0 0
          %1439 = vperm.xlu0 %1438, %v1205
          %v1440 = vpop.permute.xlu0 %1439
          %1443 = vset.pattern.permute.xlu0 0
          %1444 = vperm.xlu0 %1443, %v1206
          %v1445 = vpop.permute.xlu0 %1444
          %1448 = vset.pattern.permute.xlu0 0
          %1449 = vperm.xlu0 %1448, %v1207
          %v1450 = vpop.permute.xlu0 %1449
          %1453 = vset.pattern.permute.xlu0 0
          %1454 = vperm.xlu0 %1453, %v1208
          %v1455 = vpop.permute.xlu0 %1454
          %1458 = vset.pattern.permute.xlu0 0
          %1459 = vperm.xlu0 %1458, %v1209
          %v1460 = vpop.permute.xlu0 %1459
          %1463 = vset.pattern.permute.xlu0 0
          %1464 = vperm.xlu0 %1463, %v1210
          %v1465 = vpop.permute.xlu0 %1464
          %1468 = vset.pattern.permute.xlu0 0
          %1469 = vperm.xlu0 %1468, %v1211
          %v1470 = vpop.permute.xlu0 %1469
          %1473 = vset.pattern.permute.xlu0 0
          %1474 = vperm.xlu0 %1473, %v1212
          %v1475 = vpop.permute.xlu0 %1474
          %1478 = vset.pattern.permute.xlu0 0
          %1479 = vperm.xlu0 %1478, %v1213
          %v1480 = vpop.permute.xlu0 %1479
          %1483 = vset.pattern.permute.xlu0 0
          %1484 = vperm.xlu0 %1483, %v1214
          %v1485 = vpop.permute.xlu0 %1484
          %v1487 = vmul.f32 %v1344, %v1410
          %v1488 = vmul.f32 %v1346, %v1410
          %v1489 = vmul.f32 %v1348, %v1415
          %v1490 = vmul.f32 %v1350, %v1415
          %v1491 = vmul.f32 %v1352, %v1420
          %v1492 = vmul.f32 %v1354, %v1420
          %v1493 = vmul.f32 %v1356, %v1425
          %v1494 = vmul.f32 %v1358, %v1425
          %v1495 = vmul.f32 %v1360, %v1430
          %v1496 = vmul.f32 %v1362, %v1430
          %v1497 = vmul.f32 %v1364, %v1435
          %v1498 = vmul.f32 %v1366, %v1435
          %v1499 = vmul.f32 %v1368, %v1440
          %v1500 = vmul.f32 %v1370, %v1440
          %v1501 = vmul.f32 %v1372, %v1445
          %v1502 = vmul.f32 %v1374, %v1445
          %v1503 = vmul.f32 %v1376, %v1450
          %v1504 = vmul.f32 %v1378, %v1450
          %v1505 = vmul.f32 %v1380, %v1455
          %v1506 = vmul.f32 %v1382, %v1455
          %v1507 = vmul.f32 %v1384, %v1460
          %v1508 = vmul.f32 %v1386, %v1460
          %v1509 = vmul.f32 %v1388, %v1465
          %v1510 = vmul.f32 %v1390, %v1465
          %v1511 = vmul.f32 %v1392, %v1470
          %v1512 = vmul.f32 %v1394, %v1470
          %v1513 = vmul.f32 %v1396, %v1475
          %v1514 = vmul.f32 %v1398, %v1475
          %v1515 = vmul.f32 %v1400, %v1480
          %v1516 = vmul.f32 %v1402, %v1480
          %v1517 = vmul.f32 %v1404, %v1485
          %v1518 = vmul.f32 %v1406, %v1485
          %1519 = vst [vmem:[%s391] sm:$0xff] %v1487
          %1520 = vst [vmem:[%s391 + $0x8] sm:$0xff] %v1488
          %1521 = vst [vmem:[%s391 + $0x10] sm:$0xff] %v1489
          %1522 = vst [vmem:[%s391 + $0x18] sm:$0xff] %v1490
          %1523 = vst [vmem:[%s391 + $0x20] sm:$0xff] %v1491
          %1524 = vst [vmem:[%s391 + $0x28] sm:$0xff] %v1492
          %1525 = vst [vmem:[%s391 + $0x30] sm:$0xff] %v1493
          %1526 = vst [vmem:[%s391 + $0x38] sm:$0xff] %v1494
          %1527 = vst [vmem:[%s391 + $0x40] sm:$0xff] %v1495
          %1528 = vst [vmem:[%s391 + $0x48] sm:$0xff] %v1496
          %1529 = vst [vmem:[%s391 + $0x50] sm:$0xff] %v1497
          %1530 = vst [vmem:[%s391 + $0x58] sm:$0xff] %v1498
          %1531 = vst [vmem:[%s391 + $0x60] sm:$0xff] %v1499
          %1532 = vst [vmem:[%s391 + $0x68] sm:$0xff] %v1500
          %1533 = vst [vmem:[%s391 + $0x70] sm:$0xff] %v1501
          %1534 = vst [vmem:[%s391 + $0x78] sm:$0xff] %v1502
          %1535 = vst [vmem:[%s391 + $0x80] sm:$0xff] %v1503
          %1536 = vst [vmem:[%s391 + $0x88] sm:$0xff] %v1504
          %1537 = vst [vmem:[%s391 + $0x90] sm:$0xff] %v1505
          %1538 = vst [vmem:[%s391 + $0x98] sm:$0xff] %v1506
          %1539 = vst [vmem:[%s391 + $0xa0] sm:$0xff] %v1507
          %1540 = vst [vmem:[%s391 + $0xa8] sm:$0xff] %v1508
          %1541 = vst [vmem:[%s391 + $0xb0] sm:$0xff] %v1509
          %1542 = vst [vmem:[%s391 + $0xb8] sm:$0xff] %v1510
          %1543 = vst [vmem:[%s391 + $0xc0] sm:$0xff] %v1511
          %1544 = vst [vmem:[%s391 + $0xc8] sm:$0xff] %v1512
          %1545 = vst [vmem:[%s391 + $0xd0] sm:$0xff] %v1513
          %1546 = vst [vmem:[%s391 + $0xd8] sm:$0xff] %v1514
          %1547 = vst [vmem:[%s391 + $0xe0] sm:$0xff] %v1515
          %1548 = vst [vmem:[%s391 + $0xe8] sm:$0xff] %v1516
          %1549 = vst [vmem:[%s391 + $0xf0] sm:$0xff] %v1517
          %1550 = vst [vmem:[%s391 + $0xf8] sm:$0xff] %v1518
          %v1551 = vld [vmem:[#allocation4] sm:$0xff]
          %v1552 = vld [vmem:[#allocation4 + $0x8] sm:$0xff]
          %v1553 = vld [vmem:[#allocation4 + $0x10] sm:$0xff]
          %v1554 = vld [vmem:[#allocation4 + $0x18] sm:$0xff]
          %v1555 = vld [vmem:[#allocation4 + $0x20] sm:$0xff]
          %v1556 = vld [vmem:[#allocation4 + $0x28] sm:$0xff]
          %v1557 = vld [vmem:[#allocation4 + $0x30] sm:$0xff]
          %v1558 = vld [vmem:[#allocation4 + $0x38] sm:$0xff]
          %v1559 = vld [vmem:[#allocation4 + $0x40] sm:$0xff]
          %v1560 = vld [vmem:[#allocation4 + $0x48] sm:$0xff]
          %v1561 = vld [vmem:[#allocation4 + $0x50] sm:$0xff]
          %v1562 = vld [vmem:[#allocation4 + $0x58] sm:$0xff]
          %v1563 = vld [vmem:[#allocation4 + $0x60] sm:$0xff]
          %v1564 = vld [vmem:[#allocation4 + $0x68] sm:$0xff]
          %v1565 = vld [vmem:[#allocation4 + $0x70] sm:$0xff]
          %v1566 = vld [vmem:[#allocation4 + $0x78] sm:$0xff]
          %v1567 = vld [vmem:[%s352] sm:$0xff]
          %v1568 = vld [vmem:[%s352 + $0x8] sm:$0xff]
          %v1569 = vld [vmem:[%s352 + $0x10] sm:$0xff]
          %v1570 = vld [vmem:[%s352 + $0x18] sm:$0xff]
          %v1571 = vld [vmem:[%s352 + $0x20] sm:$0xff]
          %v1572 = vld [vmem:[%s352 + $0x28] sm:$0xff]
          %v1573 = vld [vmem:[%s352 + $0x30] sm:$0xff]
          %v1574 = vld [vmem:[%s352 + $0x38] sm:$0xff]
          %v1575 = vld [vmem:[%s352 + $0x40] sm:$0xff]
          %v1576 = vld [vmem:[%s352 + $0x48] sm:$0xff]
          %v1577 = vld [vmem:[%s352 + $0x50] sm:$0xff]
          %v1578 = vld [vmem:[%s352 + $0x58] sm:$0xff]
          %v1579 = vld [vmem:[%s352 + $0x60] sm:$0xff]
          %v1580 = vld [vmem:[%s352 + $0x68] sm:$0xff]
          %v1581 = vld [vmem:[%s352 + $0x70] sm:$0xff]
          %v1582 = vld [vmem:[%s352 + $0x78] sm:$0xff]
          %v1583 = vld [vmem:[%s352 + $0x80] sm:$0xff]
          %v1584 = vld [vmem:[%s352 + $0x88] sm:$0xff]
          %v1585 = vld [vmem:[%s352 + $0x90] sm:$0xff]
          %v1586 = vld [vmem:[%s352 + $0x98] sm:$0xff]
          %v1587 = vld [vmem:[%s352 + $0xa0] sm:$0xff]
          %v1588 = vld [vmem:[%s352 + $0xa8] sm:$0xff]
          %v1589 = vld [vmem:[%s352 + $0xb0] sm:$0xff]
          %v1590 = vld [vmem:[%s352 + $0xb8] sm:$0xff]
          %v1591 = vld [vmem:[%s352 + $0xc0] sm:$0xff]
          %v1592 = vld [vmem:[%s352 + $0xc8] sm:$0xff]
          %v1593 = vld [vmem:[%s352 + $0xd0] sm:$0xff]
          %v1594 = vld [vmem:[%s352 + $0xd8] sm:$0xff]
          %v1595 = vld [vmem:[%s352 + $0xe0] sm:$0xff]
          %v1596 = vld [vmem:[%s352 + $0xe8] sm:$0xff]
          %v1597 = vld [vmem:[%s352 + $0xf0] sm:$0xff]
          %v1598 = vld [vmem:[%s352 + $0xf8] sm:$0xff]
          %1599 = vmatprep.subr.mxu0 0.0
          %1600 = vmatpush1.msra.mxu0 %v1567
          %1601 = vmatprep.subr.mxu0 0.0
          %1602 = vmatpush1.msra.mxu0 %v1568
          %1603 = vmatprep.subr.mxu0 0.0
          %1604 = vmatpush1.msra.mxu0 %v1569
          %1605 = vmatprep.subr.mxu0 0.0
          %1606 = vmatpush1.msra.mxu0 %v1570
          %1607 = vmatprep.subr.mxu0 0.0
          %1608 = vmatpush1.msra.mxu0 %v1571
          %1609 = vmatprep.subr.mxu0 0.0
          %1610 = vmatpush1.msra.mxu0 %v1572
          %1611 = vmatprep.subr.mxu0 0.0
          %1612 = vmatpush1.msra.mxu0 %v1573
          %1613 = vmatprep.subr.mxu0 0.0
          %1614 = vmatpush1.msra.mxu0 %v1574
          %1615 = vmatprep.subr.mxu0 0.0
          %1616 = vmatpush1.msra.mxu0 %v1575
          %1617 = vmatprep.subr.mxu0 0.0
          %1618 = vmatpush1.msra.mxu0 %v1576
          %1619 = vmatprep.subr.mxu0 0.0
          %1620 = vmatpush1.msra.mxu0 %v1577
          %1621 = vmatprep.subr.mxu0 0.0
          %1622 = vmatpush1.msra.mxu0 %v1578
          %1623 = vmatprep.subr.mxu0 0.0
          %1624 = vmatpush1.msra.mxu0 %v1579
          %1625 = vmatprep.subr.mxu0 0.0
          %1626 = vmatpush1.msra.mxu0 %v1580
          %1627 = vmatprep.subr.mxu0 0.0
          %1628 = vmatpush1.msra.mxu0 %v1581
          %1629 = vmatprep.subr.mxu0 0.0
          %1630 = vmatpush1.msra.mxu0 %v1582
          %1631 = vmatprep.subr.mxu0 0.0
          %1632 = vmatpush1.msra.mxu0 %v1583
          %1633 = vmatprep.subr.mxu0 0.0
          %1634 = vmatpush1.msra.mxu0 %v1584
          %1635 = vmatprep.subr.mxu0 0.0
          %1636 = vmatpush1.msra.mxu0 %v1585
          %1637 = vmatprep.subr.mxu0 0.0
          %1638 = vmatpush1.msra.mxu0 %v1586
          %1639 = vmatprep.subr.mxu0 0.0
          %1640 = vmatpush1.msra.mxu0 %v1587
          %1641 = vmatprep.subr.mxu0 0.0
          %1642 = vmatpush1.msra.mxu0 %v1588
          %1643 = vmatprep.subr.mxu0 0.0
          %1644 = vmatpush1.msra.mxu0 %v1589
          %1645 = vmatprep.subr.mxu0 0.0
          %1646 = vmatpush1.msra.mxu0 %v1590
          %1647 = vmatprep.subr.mxu0 0.0
          %1648 = vmatpush1.msra.mxu0 %v1591
          %1649 = vmatprep.subr.mxu0 0.0
          %1650 = vmatpush1.msra.mxu0 %v1592
          %1651 = vmatprep.subr.mxu0 0.0
          %1652 = vmatpush1.msra.mxu0 %v1593
          %1653 = vmatprep.subr.mxu0 0.0
          %1654 = vmatpush1.msra.mxu0 %v1594
          %1655 = vmatprep.subr.mxu0 0.0
          %1656 = vmatpush1.msra.mxu0 %v1595
          %1657 = vmatprep.subr.mxu0 0.0
          %1658 = vmatpush1.msra.mxu0 %v1596
          %1659 = vmatprep.subr.mxu0 0.0
          %1660 = vmatpush1.msra.mxu0 %v1597
          %1661 = vmatprep.subr.mxu0 0.0
          %1662 = vmatpush1.msra.mxu0 %v1598
          %1663 = vmatprep.mubr.f32.mxu0 %v1488
          %1664 = vmatmul.mubr.f32.gmra.mrb[0].mxu0 %v1487
          %v1665 = vpop.f32.mrb[0].mxu0
          %v1666 = vadd.f32 0.0, %v1665
          %v1667 = vpop.f32.mrb[0].mxu0
          %1668 = vmatprep.mubr.f32.mxu0 %v1490
          %1669 = vmatmul.mubr.f32.gmra.mrb[0].mxu0 %v1489
          %v1670 = vpop.f32.mrb[0].mxu0
          %v1671 = vadd.f32 0.0, %v1670
          %v1672 = vpop.f32.mrb[0].mxu0
          %1673 = vmatprep.mubr.f32.mxu0 %v1492
          %1674 = vmatmul.mubr.f32.gmra.mrb[0].mxu0 %v1491
          %v1675 = vpop.f32.mrb[0].mxu0
          %v1676 = vadd.f32 0.0, %v1675
          %v1677 = vpop.f32.mrb[0].mxu0
          %1678 = vmatprep.mubr.f32.mxu0 %v1494
          %1679 = vmatmul.mubr.f32.gmra.mrb[0].mxu0 %v1493
          %v1680 = vpop.f32.mrb[0].mxu0
          %v1681 = vadd.f32 0.0, %v1680
          %v1682 = vpop.f32.mrb[0].mxu0
          %1683 = vmatprep.mubr.f32.mxu0 %v1496
          %1684 = vmatmul.mubr.f32.gmra.mrb[0].mxu0 %v1495
          %v1685 = vpop.f32.mrb[0].mxu0
          %v1686 = vadd.f32 0.0, %v1685
          %v1687 = vpop.f32.mrb[0].mxu0
          %1688 = vmatprep.mubr.f32.mxu0 %v1498
          %1689 = vmatmul.mubr.f32.gmra.mrb[0].mxu0 %v1497
          %v1690 = vpop.f32.mrb[0].mxu0
          %v1691 = vadd.f32 0.0, %v1690
          %v1692 = vpop.f32.mrb[0].mxu0
          %1693 = vmatprep.mubr.f32.mxu0 %v1500
          %1694 = vmatmul.mubr.f32.gmra.mrb[0].mxu0 %v1499
          %v1695 = vpop.f32.mrb[0].mxu0
          %v1696 = vadd.f32 0.0, %v1695
          %v1697 = vpop.f32.mrb[0].mxu0
          %1698 = vmatprep.mubr.f32.mxu0 %v1502
          %1699 = vmatmul.mubr.f32.gmra.mrb[0].mxu0 %v1501
          %v1700 = vpop.f32.mrb[0].mxu0
          %v1701 = vadd.f32 0.0, %v1700
          %v1702 = vpop.f32.mrb[0].mxu0
          %1703 = vmatprep.mubr.f32.mxu0 %v1504
          %1704 = vmatmul.mubr.f32.gmra.mrb[0].mxu0 %v1503
          %v1705 = vpop.f32.mrb[0].mxu0
          %v1706 = vadd.f32 0.0, %v1705
          %v1707 = vpop.f32.mrb[0].mxu0
          %1708 = vmatprep.mubr.f32.mxu0 %v1506
          %1709 = vmatmul.mubr.f32.gmra.mrb[0].mxu0 %v1505
          %v1710 = vpop.f32.mrb[0].mxu0
          %v1711 = vadd.f32 0.0, %v1710
          %v1712 = vpop.f32.mrb[0].mxu0
          %1713 = vmatprep.mubr.f32.mxu0 %v1508
          %1714 = vmatmul.mubr.f32.gmra.mrb[0].mxu0 %v1507
          %v1715 = vpop.f32.mrb[0].mxu0
          %v1716 = vadd.f32 0.0, %v1715
          %v1717 = vpop.f32.mrb[0].mxu0
          %1718 = vmatprep.mubr.f32.mxu0 %v1510
          %1719 = vmatmul.mubr.f32.gmra.mrb[0].mxu0 %v1509
          %v1720 = vpop.f32.mrb[0].mxu0
          %v1721 = vadd.f32 0.0, %v1720
          %v1722 = vpop.f32.mrb[0].mxu0
          %1723 = vmatprep.mubr.f32.mxu0 %v1512
          %1724 = vmatmul.mubr.f32.gmra.mrb[0].mxu0 %v1511
          %v1725 = vpop.f32.mrb[0].mxu0
          %v1726 = vadd.f32 0.0, %v1725
          %v1727 = vpop.f32.mrb[0].mxu0
          %1728 = vmatprep.mubr.f32.mxu0 %v1514
          %1729 = vmatmul.mubr.f32.gmra.mrb[0].mxu0 %v1513
          %v1730 = vpop.f32.mrb[0].mxu0
          %v1731 = vadd.f32 0.0, %v1730
          %v1732 = vpop.f32.mrb[0].mxu0
          %1733 = vmatprep.mubr.f32.mxu0 %v1516
          %1734 = vmatmul.mubr.f32.gmra.mrb[0].mxu0 %v1515
          %v1735 = vpop.f32.mrb[0].mxu0
          %v1736 = vadd.f32 0.0, %v1735
          %v1737 = vpop.f32.mrb[0].mxu0
          %1738 = vmatprep.mubr.f32.mxu0 %v1518
          %1739 = vmatmul.mubr.f32.gmra.mrb[0].mxu0 %v1517
          %v1740 = vpop.f32.mrb[0].mxu0
          %v1741 = vadd.f32 0.0, %v1740
          %v1742 = vpop.f32.mrb[0].mxu0
          %1743 = vdwg.mxu0
          %v1744 = vadd.f32 %v1551, %v1666
          %v1745 = vadd.f32 %v1552, %v1671
          %v1746 = vadd.f32 %v1553, %v1676
          %v1747 = vadd.f32 %v1554, %v1681
          %v1748 = vadd.f32 %v1555, %v1686
          %v1749 = vadd.f32 %v1556, %v1691
          %v1750 = vadd.f32 %v1557, %v1696
          %v1751 = vadd.f32 %v1558, %v1701
          %v1752 = vadd.f32 %v1559, %v1706
          %v1753 = vadd.f32 %v1560, %v1711
          %v1754 = vadd.f32 %v1561, %v1716
          %v1755 = vadd.f32 %v1562, %v1721
          %v1756 = vadd.f32 %v1563, %v1726
          %v1757 = vadd.f32 %v1564, %v1731
          %v1758 = vadd.f32 %v1565, %v1736
          %v1759 = vadd.f32 %v1566, %v1741
          %1760 = vst [vmem:[#allocation4] sm:$0xff] %v1744
          %1761 = vst [vmem:[#allocation4 + $0x8] sm:$0xff] %v1745
          %1762 = vst [vmem:[#allocation4 + $0x10] sm:$0xff] %v1746
          %1763 = vst [vmem:[#allocation4 + $0x18] sm:$0xff] %v1747
          %1764 = vst [vmem:[#allocation4 + $0x20] sm:$0xff] %v1748
          %1765 = vst [vmem:[#allocation4 + $0x28] sm:$0xff] %v1749
          %1766 = vst [vmem:[#allocation4 + $0x30] sm:$0xff] %v1750
          %1767 = vst [vmem:[#allocation4 + $0x38] sm:$0xff] %v1751
          %1768 = vst [vmem:[#allocation4 + $0x40] sm:$0xff] %v1752
          %1769 = vst [vmem:[#allocation4 + $0x48] sm:$0xff] %v1753
          %1770 = vst [vmem:[#allocation4 + $0x50] sm:$0xff] %v1754
          %1771 = vst [vmem:[#allocation4 + $0x58] sm:$0xff] %v1755
          %1772 = vst [vmem:[#allocation4 + $0x60] sm:$0xff] %v1756
          %1773 = vst [vmem:[#allocation4 + $0x68] sm:$0xff] %v1757
          %1774 = vst [vmem:[#allocation4 + $0x70] sm:$0xff] %v1758
          %1775 = vst [vmem:[#allocation4 + $0x78] sm:$0xff] %v1759
        $region56: #{tpu_custom_call.1} parent=31 // pred_fallthru
          _
        %p1776 = scmp.eq.s32.totalorder %s35, 3
        // Predicated region
        $region57: #{tpu_custom_call.1} parent=31 // pred_check
          %p1777 = pneg %p1776
        $region58: #{tpu_custom_call.1} parent=31 // pred_check_branch
          %1779 = sbr.rel (%p1777) target = $region60
        $region59: #{tpu_custom_call.1} parent=31 // pred_region
          %v1780 = vld [vmem:[#allocation4] sm:$0xff]
          %v1781 = vld [vmem:[#allocation4 + $0x8] sm:$0xff]
          %v1782 = vld [vmem:[#allocation4 + $0x10] sm:$0xff]
          %v1783 = vld [vmem:[#allocation4 + $0x18] sm:$0xff]
          %v1784 = vld [vmem:[#allocation4 + $0x20] sm:$0xff]
          %v1785 = vld [vmem:[#allocation4 + $0x28] sm:$0xff]
          %v1786 = vld [vmem:[#allocation4 + $0x30] sm:$0xff]
          %v1787 = vld [vmem:[#allocation4 + $0x38] sm:$0xff]
          %v1788 = vld [vmem:[#allocation4 + $0x40] sm:$0xff]
          %v1789 = vld [vmem:[#allocation4 + $0x48] sm:$0xff]
          %v1790 = vld [vmem:[#allocation4 + $0x50] sm:$0xff]
          %v1791 = vld [vmem:[#allocation4 + $0x58] sm:$0xff]
          %v1792 = vld [vmem:[#allocation4 + $0x60] sm:$0xff]
          %v1793 = vld [vmem:[#allocation4 + $0x68] sm:$0xff]
          %v1794 = vld [vmem:[#allocation4 + $0x70] sm:$0xff]
          %v1795 = vld [vmem:[#allocation4 + $0x78] sm:$0xff]
          %1796 = vst [vmem:[%s384] sm:$0xff] %v1780
          %1797 = vst [vmem:[%s384 + $0x8] sm:$0xff] %v1781
          %1798 = vst [vmem:[%s384 + $0x10] sm:$0xff] %v1782
          %1799 = vst [vmem:[%s384 + $0x18] sm:$0xff] %v1783
          %1800 = vst [vmem:[%s384 + $0x20] sm:$0xff] %v1784
          %1801 = vst [vmem:[%s384 + $0x28] sm:$0xff] %v1785
          %1802 = vst [vmem:[%s384 + $0x30] sm:$0xff] %v1786
          %1803 = vst [vmem:[%s384 + $0x38] sm:$0xff] %v1787
          %1804 = vst [vmem:[%s384 + $0x40] sm:$0xff] %v1788
          %1805 = vst [vmem:[%s384 + $0x48] sm:$0xff] %v1789
          %1806 = vst [vmem:[%s384 + $0x50] sm:$0xff] %v1790
          %1807 = vst [vmem:[%s384 + $0x58] sm:$0xff] %v1791
          %1808 = vst [vmem:[%s384 + $0x60] sm:$0xff] %v1792
          %1809 = vst [vmem:[%s384 + $0x68] sm:$0xff] %v1793
          %1810 = vst [vmem:[%s384 + $0x70] sm:$0xff] %v1794
          %1811 = vst [vmem:[%s384 + $0x78] sm:$0xff] %v1795
        $region60: #{tpu_custom_call.1} parent=31 // pred_fallthru
          _
        %s1812 = sand.u32 %s171, 1
        %s1813 = scalar_lea.sflag [#allocation7], %s1812
        %s1814 = sand.u32 %s171, 1
        %s1815 = smul.addr %s1814, 128
        %s1816 = scalar_lea.vmem [#allocation11], %s1815
        %s1817 = sand.u32 %s207, 1
        %s1818 = scalar_lea.sflag [#allocation13], %s1817
        %s1819 = sand.u32 %s207, 1
        %s1820 = smul.addr %s1819, 256
        %s1821 = scalar_lea.vmem [#allocation12], %s1820
        // Predicated region
        $region61: #{tpu_custom_call.1} parent=31 // pred_check
          %p1822 = pneg %p181
        $region62: #{tpu_custom_call.1} parent=31 // pred_check_branch
          %1824 = sbr.rel (%p1822) target = $region64
        $region63: #{tpu_custom_call.1} parent=31 // pred_region
          %s1825 = smul.u32 16, %s34
          %s1827 = ssub.s32 2048, 2048
          %1828 = vsyncadd %s1813, %s1827
          %s1829 = smul.addr %s33, 32
          %s1830 = sadd.s32 %s1825, %s1829
          %s1831 = smul.addr %s1830, 128
          %s1832 = scalar_lea.hbm %s3, %s1831
          %s1833 = sshll.u32 %s1816, 4
          %s1834 = int_to_ptr.vmem [resolvable:$true] %s1833
          %1839 = dma.vmem_to_hbm [thread:$0]  %s1834, 2048, %s1832, %s1813, 128, 128, 8
        $region64: #{tpu_custom_call.1} parent=31 // pred_fallthru
          _
        // Predicated region
        $region65: #{tpu_custom_call.1} parent=31 // pred_check
          %p1840 = pneg %p217
        $region66: #{tpu_custom_call.1} parent=31 // pred_check_branch
          %1842 = sbr.rel (%p1840) target = $region68
        $region67: #{tpu_custom_call.1} parent=31 // pred_region
          %s1843 = ssub.s32 %s35, 2
          %p1844 = scmp.gt.s32.totalorder %s1843, 0
          %s1845 = scalar_select %p1844, %s1843, 0
          %s1846 = smul.u32 16, %s34
          %s1847 = smul.u32 2, %s1845
          %s1849 = ssub.s32 4096, 4096
          %1850 = vsyncadd %s1818, %s1849
          %s1851 = smul.addr %s1846, 4
          %s1852 = sadd.s32 %s1847, %s1851
          %s1853 = smul.addr %s33, 128
          %s1854 = sadd.s32 %s1852, %s1853
          %s1855 = smul.addr %s1854, 128
          %s1856 = scalar_lea.hbm %s4, %s1855
          %s1857 = sshll.u32 %s1821, 4
          %s1858 = int_to_ptr.vmem [resolvable:$true] %s1857
          %1863 = dma.vmem_to_hbm [thread:$0]  %s1858, 4096, %s1856, %s1818, 256, 512, 16
        $region68: #{tpu_custom_call.1} parent=31 // pred_fallthru
          _
      $region32: #{tpu_custom_call.1} parent=5 // pred_fallthru
        _
      %p1864 = scmp.le.s32.totalorder 2, %s23
      // Predicated region
      $region69: #{tpu_custom_call.1} parent=5 // pred_check
        %p1865 = pneg %p1864
      $region70: #{tpu_custom_call.1} parent=5 // pred_check_branch
        %1867 = sbr.rel (%p1865) target = $region72
      $region71: #{tpu_custom_call.1} parent=5 // pred_region
        %s1868 = ssub.s32 %s23, 2
        // Predicated region
        $region73: #{tpu_custom_call.1} parent=71 // pred_check
          %p1869 = pneg %p187
        $region74: #{tpu_custom_call.1} parent=71 // pred_check_branch
          %1871 = sbr.rel (%p1869) target = $region76
        $region75: #{tpu_custom_call.1} parent=71 // pred_region
          %s1872 = sand.u32 %s172, 1
          %s1873 = scalar_lea.sflag [#allocation7], %s1872
          %s1874 = sand.u32 %s172, 1
          %s1875 = smul.addr %s1874, 128
          %s1876 = scalar_lea.vmem [#allocation11], %s1875
          %1877 = dma.done %s1873, 2048
        $region76: #{tpu_custom_call.1} parent=71 // pred_fallthru
          _
        // Predicated region
        $region77: #{tpu_custom_call.1} parent=71 // pred_check
          %p1878 = pneg %p223
        $region78: #{tpu_custom_call.1} parent=71 // pred_check_branch
          %1880 = sbr.rel (%p1878) target = $region80
        $region79: #{tpu_custom_call.1} parent=71 // pred_region
          %s1881 = sand.u32 %s208, 1
          %s1882 = scalar_lea.sflag [#allocation13], %s1881
          %s1883 = sand.u32 %s208, 1
          %s1884 = smul.addr %s1883, 256
          %s1885 = scalar_lea.vmem [#allocation12], %s1884
          %1886 = dma.done %s1882, 4096
        $region80: #{tpu_custom_call.1} parent=71 // pred_fallthru
          _
      $region72: #{tpu_custom_call.1} parent=5 // pred_fallthru
        _
    $region6: #{tpu_custom_call.1} parent=1 // loop_footer
      %s27 = sadd.s32 1, %s23
    $region7: #{tpu_custom_call.1} parent=1 // loop_footer_branch
      %22 = sbr.rel target = $region3
    $region8: #{tpu_custom_call.1} parent=1 // loop_exit
      _
    %1887 = vsyncpa [#allocation6], 1
    %s1888 = scalar_lea.sflag [#allocation6], 1
    %1889 = vsyncpa %s1888, 1
    %1890 = vsyncpa [#allocation9], 1
    %s1891 = scalar_lea.sflag [#allocation9], 1
    %1892 = vsyncpa %s1891, 1
    %1893 = vsyncpa [#allocation7], 1
    %s1894 = scalar_lea.sflag [#allocation7], 1
    %1895 = vsyncpa %s1894, 1
    %1896 = vsyncpa [#allocation13], 1
    %s1897 = scalar_lea.sflag [#allocation13], 1
    %1898 = vsyncpa %s1897, 1

</llo_original>
